<compile_context>
chip_gen: v6e
topology: v6e:2x2x1
jax: 0.10.0
libtpu: 0.0.40
codegen_flags: <defaults>
</compile_context>

<pallas_src>
import functools

import jax
import jax.numpy as jnp
from jax.experimental import pallas as pl
from jax.experimental.pallas import tpu as pltpu


def _compiler_params(dim_sem, vmem_mib):
    return pltpu.CompilerParams(
        dimension_semantics=dim_sem,
        vmem_limit_bytes=int(vmem_mib) * 1024 * 1024,
    )


def _vmem_budget_mib():
    """Conservative per-core VMEM budget used to pick FC tilings."""
    try:
        kind = jax.devices()[0].device_kind.lower()
    except Exception:
        kind = ""
    if ("v4" in kind) or ("v5" in kind) or ("v6" in kind):
        return 128          # single TensorCore, 128 MiB VMEM
    return 64               # v7x / unknown: assume 64 MiB per-TC budget


# --------------------------------------------------------------------------
# Conv2d(3x3, pad=1) + BatchNorm2d(eval) + ReLU + MaxPool2d(2,2), fused.
#
# The im2col rows are pre-ordered phase-major: pool phase g = (hr, wr) in
# {0..3} first, then pooled output position (ho, wo) row-major, with each
# phase group zero-padded to n_pool_pad rows (multiple of 8) so the pooling
# slices are sublane-aligned.  Row g*n_pool_pad + ho*Wo + wo holds the 3x3
# patch of conv-output pixel (2*ho+hr, 2*wo+wr).  The 2x2 max-pool is an
# elementwise max of the four row groups of the matmul result, taken after
# BN affine + ReLU, exactly as torch.
# --------------------------------------------------------------------------
def _conv_bn_relu_pool_kernel(x_ref, w_ref, s_ref, b_ref, o_ref, *,
                              n_pool, n_pool_pad):
    y = jnp.dot(x_ref[0], w_ref[...], preferred_element_type=jnp.float32)
    y = jnp.maximum(y * s_ref[...] + b_ref[...], 0.0)
    npp = n_pool_pad
    p = jnp.maximum(
        jnp.maximum(y[0 * npp:1 * npp], y[1 * npp:2 * npp]),
        jnp.maximum(y[2 * npp:3 * npp], y[3 * npp:4 * npp]))
    o_ref[0] = p[:n_pool].astype(o_ref.dtype)


def _im2col_phase_major(x, n_pool_pad):
    """x: (N,H,W,C) -> (N, 4*n_pool_pad, 9*C) patches for 3x3/pad=1/stride=1
    conv, rows ordered (pool-phase, pooled-row, pooled-col), each phase group
    zero-padded to n_pool_pad rows."""
    N, H, W, C = x.shape
    assert H % 2 == 0 and W % 2 == 0, "H and W must be even for 2x2 maxpool"
    Ho, Wo = H // 2, W // 2
    n_pool = Ho * Wo
    xp = jnp.pad(x, ((0, 0), (1, 1), (1, 1), (0, 0)))
    taps = []
    for dy in range(3):
        for dx in range(3):
            t = xp[:, dy:dy + H, dx:dx + W, :]              # conv tap (N,H,W,C)
            t = t.reshape(N, Ho, 2, Wo, 2, C)               # (N,ho,hr,wo,wr,C)
            t = jnp.transpose(t, (0, 2, 4, 1, 3, 5))        # (N,hr,wr,ho,wo,C)
            t = t.reshape(N, 4, n_pool, C)
            t = jnp.pad(t, ((0, 0), (0, 0), (0, n_pool_pad - n_pool), (0, 0)))
            taps.append(t.reshape(N, 4 * n_pool_pad, C))
    return jnp.concatenate(taps, axis=-1)                   # (N, 4*npp, 9*C)


def conv3x3_bn_relu_pool(x, w, scale, bias):
    """x: (N,H,W,Cin) NHWC -> (N,Ho,Wo,Cout) after conv+BN+ReLU+maxpool2x2."""
    N, H, W, Cin = x.shape
    Ho, Wo = H // 2, W // 2
    n_pool = Ho * Wo
    n_pool_pad = ((n_pool + 7) // 8) * 8
    Cout = w.shape[-1]
    # TODO(synk): the im2col patch gather still materializes a 9x-expanded copy
    # in HBM (small at these shapes); a tap-folded grid axis would avoid it.
    cols = _im2col_phase_major(x.astype(jnp.bfloat16), n_pool_pad)
    w_mat = w.reshape(9 * Cin, Cout).astype(jnp.bfloat16)   # tap-major, ch-minor
    kernel = functools.partial(_conv_bn_relu_pool_kernel,
                               n_pool=n_pool, n_pool_pad=n_pool_pad)
    out = pl.pallas_call(
        kernel,
        out_shape=jax.ShapeDtypeStruct((N, n_pool, Cout), jnp.bfloat16),
        grid_spec=pltpu.PrefetchScalarGridSpec(
            num_scalar_prefetch=0,
            grid=(N,),
            in_specs=[
                pl.BlockSpec((1, 4 * n_pool_pad, 9 * Cin), lambda n: (n, 0, 0)),
                pl.BlockSpec((9 * Cin, Cout), lambda n: (0, 0)),
                pl.BlockSpec((1, Cout), lambda n: (0, 0)),
                pl.BlockSpec((1, Cout), lambda n: (0, 0)),
            ],
            out_specs=pl.BlockSpec((1, n_pool, Cout), lambda n: (n, 0, 0)),
        ),
        compiler_params=_compiler_params(("parallel",), 32),
    )(cols, w_mat, scale.reshape(1, Cout), bias.reshape(1, Cout))
    return out.reshape(N, Ho, Wo, Cout)


# --------------------------------------------------------------------------
# Fused (x @ W) * scale + bias [+ ReLU] linear kernel, tiled over (Nout, K).
# W may be int8 (per-output-channel quantized, dequant scale folded into
# `scale`); it is widened to bf16 in VMEM so the MXU always sees bf16.
# --------------------------------------------------------------------------
def _fc_kernel(x_ref, w_ref, s_ref, b_ref, o_ref, acc_ref, *, relu):
    k = pl.program_id(2)

    @pl.when(k == 0)
    def _():
        acc_ref[...] = jnp.zeros_like(acc_ref)

    w = w_ref[...]
    if w.dtype != jnp.bfloat16:
        w = w.astype(jnp.bfloat16)        # in-VMEM dequant of int8 weight tile
    acc_ref[...] += jnp.dot(x_ref[0], w, preferred_element_type=jnp.float32)

    @pl.when(k == pl.num_programs(2) - 1)
    def _():
        y = acc_ref[...] * s_ref[...] + b_ref[...]
        if relu:
            y = jnp.maximum(y, 0.0)
        o_ref[0] = y.astype(o_ref.dtype)


def linear_affine(x, w, scale, bias, *, relu, tk, tn, vmem_mib,
                  out_dtype=jnp.bfloat16):
    """x: (B, M, K) bf16, w: (K, N) int8/bf16, scale/bias: (N,) f32 -> (B,M,N)."""
    B, M, K = x.shape
    K2, N = w.shape
    assert K == K2 and K % tk == 0 and N % tn == 0
    # TODO(synk): M (the sample batch) lives in a single block; if batch grows
    # to >=128 the FC layers flip from HBM-bound to MXU-bound and M should be
    # tiled as well (resizing the accumulator scratch).
    assert M <= 256, "retile M for large batches"
    kernel = functools.partial(_fc_kernel, relu=relu)
    return pl.pallas_call(
        kernel,
        out_shape=jax.ShapeDtypeStruct((B, M, N), out_dtype),
        grid_spec=pltpu.PrefetchScalarGridSpec(
            num_scalar_prefetch=0,
            grid=(B, N // tn, K // tk),
            in_specs=[
                pl.BlockSpec((1, M, tk), lambda b, j, k: (b, 0, k)),
                pl.BlockSpec((tk, tn), lambda b, j, k: (k, j)),
                pl.BlockSpec((1, tn), lambda b, j, k: (0, j)),
                pl.BlockSpec((1, tn), lambda b, j, k: (0, j)),
            ],
            out_specs=pl.BlockSpec((1, M, tn), lambda b, j, k: (b, 0, j)),
            scratch_shapes=[pltpu.VMEM((M, tn), jnp.float32)],
        ),
        compiler_params=_compiler_params(
            ("parallel", "parallel", "arbitrary"), vmem_mib),
    )(x, w, scale.reshape(1, N), bias.reshape(1, N))


# --------------------------------------------------------------------------
# Parameters (synthetic, deterministic).  BN (eval mode) + preceding bias are
# folded into per-feature scale/bias applied inside the kernels.  FC1/FC2
# weights are stored int8 (per-output-channel symmetric); the dequant scale is
# folded into the epilogue scale.  The logits layer is padded to N=128.
# --------------------------------------------------------------------------
def fold_bn(gamma, beta, mean, var, pre_bias, eps=1e-5):
    s = gamma / jnp.sqrt(var + eps)
    b = (pre_bias - mean) * s + beta
    return s, b


def quantize_int8_per_col(w):
    amax = jnp.max(jnp.abs(w), axis=0)
    qs = jnp.maximum(amax, 1e-8) / 127.0
    wq = jnp.clip(jnp.round(w / qs), -127.0, 127.0).astype(jnp.int8)
    return wq, qs


def init_params(key, num_class=10):
    keys = iter(jax.random.split(key, 32))

    def nrm(shape, fan_in):
        return jax.random.normal(next(keys), shape, jnp.float32) * jnp.sqrt(2.0 / fan_in)

    def bn(n):
        g = 1.0 + 0.1 * jax.random.normal(next(keys), (n,), jnp.float32)
        b = 0.1 * jax.random.normal(next(keys), (n,), jnp.float32)
        m = 0.1 * jax.random.normal(next(keys), (n,), jnp.float32)
        v = 1.0 + 0.1 * jnp.abs(jax.random.normal(next(keys), (n,), jnp.float32))
        return g, b, m, v

    p = {"num_class": num_class}

    # features: Conv(3->64)+BN+ReLU+MaxPool, Conv(64->512)+BN+ReLU+MaxPool
    feats = []
    for cin, cout in [(3, 64), (64, 512)]:
        w = nrm((3, 3, cin, cout), 9 * cin)
        conv_b = 0.01 * jax.random.normal(next(keys), (cout,), jnp.float32)
        s, b = fold_bn(*bn(cout), conv_b)
        feats.append((w, s, b))
    p["features"] = feats

    # classifier: Linear(25088,4096)+BN+ReLU+Drop, Linear(4096,4096)+BN+ReLU+Drop,
    #             Linear(4096,num_class)
    cls = []
    layer_defs = [(25088, 4096, True), (4096, 4096, True), (4096, num_class, False)]
    for li, (kin, kout, has_bn) in enumerate(layer_defs):
        w = nrm((kin, kout), kin)
        lin_b = 0.01 * jax.random.normal(next(keys), (kout,), jnp.float32)
        if has_bn:
            s, b = fold_bn(*bn(kout), lin_b)
        else:
            s, b = jnp.ones((kout,), jnp.float32), lin_b
        if li == 0:
            # Permute FC1 weight rows from torch's (C,H,W) flatten order to the
            # (H,W,C) order of the NHWC conv output, so the forward pass needs
            # no transpose between features and classifier (one-time cost).
            w = w.reshape(512, 7, 7, kout).transpose(1, 2, 0, 3).reshape(kin, kout)
        if kout % 128 != 0:
            # pad the logits layer to a lane-dense output width; sliced back
            # to num_class in the forward wrapper.
            pad = 128 - (kout % 128)
            w = jnp.pad(w, ((0, 0), (0, pad)))
            s = jnp.pad(s, (0, pad))
            b = jnp.pad(b, (0, pad))
        if li in (0, 1):
            wq, qs = quantize_int8_per_col(w)          # int8 weight stream
            cls.append((wq, s * qs, b, has_bn))        # dequant folded into scale
        else:
            cls.append((w.astype(jnp.bfloat16), s, b, has_bn))
    p["classifier"] = cls
    return p


# --------------------------------------------------------------------------
# Forward pass (matches VGG.forward: features -> flatten -> classifier).
# --------------------------------------------------------------------------
def vgg_forward(x_nchw, params):
    x = jnp.transpose(x_nchw, (0, 2, 3, 1))                  # NCHW -> NHWC
    for (w, s, b) in params["features"]:
        x = conv3x3_bn_relu_pool(x, w, s, b)                 # conv+BN+ReLU+pool
    n = x.shape[0]
    # NHWC flatten (FC1 weight rows permuted at init to match torch's flatten)
    h = x.reshape(n, -1)[None]                               # (1, N, 25088) bf16

    if _vmem_budget_mib() >= 128:
        # v5e / v6e: single TensorCore, 128 MiB VMEM -> full-width N tiles.
        cfg = [
            (6272, 4096, 100),   # FC1: 24.5 MiB int8 weight tiles, 4 K-steps
            (4096, 4096, 64),    # FC2: whole 16 MiB int8 weight as one tile
            (4096, 128, 16),     # logits (bf16, padded to 128 lanes)
        ]
    else:
        # v7x: two TensorCores, 64 MiB VMEM -> keep the N split on the j axis.
        cfg = [
            (6272, 2048, 48),    # FC1: 12.25 MiB int8 weight tiles, N//tn = 2
            (2048, 2048, 24),    # FC2
            (4096, 128, 16),     # logits
        ]

    for (w, s, b, relu), (tk, tn, vm) in zip(params["classifier"], cfg):
        out_dtype = jnp.bfloat16 if relu else jnp.float32
        h = linear_affine(h, w, s, b, relu=relu, tk=tk, tn=tn,
                          vmem_mib=vm, out_dtype=out_dtype)
    # TODO(synk): train-mode Dropout (stochastic masking) and train-mode
    # BatchNorm (batch statistics) are not implemented; eval semantics used.
    return h[0][:, :params["num_class"]]                     # (N, num_class)


if __name__ == "__main__":
    key = jax.random.PRNGKey(0)
    pkey, xkey = jax.random.split(key)
    params = init_params(pkey)
    # batch=2, 3 channels, 28x28 -> after two 2x2 maxpools: 512*7*7 = 25088,
    # matching the hard-coded Linear(25088, 4096) of the classifier.
    x = jax.random.normal(xkey, (2, 3, 28, 28), jnp.float32)
    out = vgg_forward(x, params)
    out = jax.block_until_ready(out)
    assert out.shape == (2, 10)
    assert bool(jnp.all(jnp.isfinite(out)))
    print("KERNEL_OK")
</pallas_src>

<mosaic_0001>
module attributes {stable_mosaic.version = 11 : i64} {
  func.func @_conv_bn_relu_pool_kernel(%arg0: i32, %arg1: memref<1x800x27xbf16, #tpu.memory_space<vmem>>, %arg2: memref<27x64xbf16, #tpu.memory_space<vmem>>, %arg3: memref<1x64xf32, #tpu.memory_space<vmem>>, %arg4: memref<1x64xf32, #tpu.memory_space<vmem>>, %arg5: memref<1x196x64xbf16, #tpu.memory_space<vmem>>) attributes {dimension_semantics = [#tpu.dimension_semantics<parallel>], iteration_bounds = array<i64: 2>, scalar_prefetch = 0 : i64, scratch_operands = 0 : i64, tpu.core_type = #tpu.core_type<tc>, window_params = [{transform_indices = @transform_0, window_bounds = array<i64: 1, 800, 27>}, {pipeline_mode = #tpu.pipeline_mode<synchronous>, transform_indices = @transform_1, window_bounds = array<i64: 27, 64>}, {pipeline_mode = #tpu.pipeline_mode<synchronous>, transform_indices = @transform_2, window_bounds = array<i64: 1, 64>}, {pipeline_mode = #tpu.pipeline_mode<synchronous>, transform_indices = @transform_3, window_bounds = array<i64: 1, 64>}, {transform_indices = @transform_4, window_bounds = array<i64: 1, 196, 64>}]} {
    %c0 = arith.constant 0 : index
    %c0_0 = arith.constant 0 : index
    %c0_1 = arith.constant 0 : index
    %0 = vector.load %arg1[%c0, %c0_0, %c0_1] : memref<1x800x27xbf16, #tpu.memory_space<vmem>>, vector<1x800x27xbf16>
    %1 = vector.shape_cast %0 : vector<1x800x27xbf16> to vector<800x27xbf16>
    %c0_2 = arith.constant 0 : index
    %c0_3 = arith.constant 0 : index
    %2 = vector.load %arg2[%c0_2, %c0_3] : memref<27x64xbf16, #tpu.memory_space<vmem>>, vector<27x64xbf16>
    %cst = arith.constant dense<0.000000e+00> : vector<800x64xf32>
    %3 = tpu.matmul %1, %2, %cst {dimension_numbers = #tpu.dot_dimension_numbers<[1], [0], [0], [1], [0, 0, 1, 1], [], []>} : vector<800x27xbf16>, vector<27x64xbf16>, vector<800x64xf32> -> vector<800x64xf32>
    %c0_4 = arith.constant 0 : index
    %c0_5 = arith.constant 0 : index
    %4 = vector.load %arg3[%c0_4, %c0_5] : memref<1x64xf32, #tpu.memory_space<vmem>>, vector<1x64xf32>
    %5 = vector.broadcast %4 : vector<1x64xf32> to vector<800x64xf32>
    %6 = arith.mulf %3, %5 : vector<800x64xf32>
    %c0_6 = arith.constant 0 : index
    %c0_7 = arith.constant 0 : index
    %7 = vector.load %arg4[%c0_6, %c0_7] : memref<1x64xf32, #tpu.memory_space<vmem>>, vector<1x64xf32>
    %8 = vector.broadcast %7 : vector<1x64xf32> to vector<800x64xf32>
    %9 = arith.addf %6, %8 : vector<800x64xf32>
    %cst_8 = arith.constant 0.000000e+00 : f32
    %10 = vector.broadcast %cst_8 : f32 to vector<800x64xf32>
    %11 = arith.maximumf %9, %10 : vector<800x64xf32>
    %12 = vector.extract_strided_slice %11 {offsets = [0, 0], sizes = [200, 64], strides = [1, 1]} : vector<800x64xf32> to vector<200x64xf32>
    %13 = vector.extract_strided_slice %11 {offsets = [200, 0], sizes = [200, 64], strides = [1, 1]} : vector<800x64xf32> to vector<200x64xf32>
    %14 = arith.maximumf %12, %13 : vector<200x64xf32>
    %15 = vector.extract_strided_slice %11 {offsets = [400, 0], sizes = [200, 64], strides = [1, 1]} : vector<800x64xf32> to vector<200x64xf32>
    %16 = vector.extract_strided_slice %11 {offsets = [600, 0], sizes = [200, 64], strides = [1, 1]} : vector<800x64xf32> to vector<200x64xf32>
    %17 = arith.maximumf %15, %16 : vector<200x64xf32>
    %18 = arith.maximumf %14, %17 : vector<200x64xf32>
    %19 = vector.extract_strided_slice %18 {offsets = [0, 0], sizes = [196, 64], strides = [1, 1]} : vector<200x64xf32> to vector<196x64xf32>
    %20 = arith.truncf %19 : vector<196x64xf32> to vector<196x64xbf16>
    %c0_9 = arith.constant 0 : index
    %c0_10 = arith.constant 0 : index
    %c0_11 = arith.constant 0 : index
    %21 = vector.load %arg5[%c0_9, %c0_10, %c0_11] : memref<1x196x64xbf16, #tpu.memory_space<vmem>>, vector<1x196x64xbf16>
    %22 = vector.shape_cast %21 : vector<1x196x64xbf16> to vector<196x64xbf16>
    %23 = vector.shape_cast %20 : vector<196x64xbf16> to vector<1x196x64xbf16>
    tpu.vector_store %arg5[%c0_9, %c0_10, %c0_11], %23 {strides = array<i32>} : memref<1x196x64xbf16, #tpu.memory_space<vmem>>, vector<1x196x64xbf16>,
    return
  }
  func.func @transform_0(%arg0: i32) -> (i32, i32, i32) {
    %c0_i32 = arith.constant 0 : i32
    %c0_i32_0 = arith.constant 0 : i32
    %c0_i32_1 = arith.constant 0 : i32
    return %arg0, %c0_i32, %c0_i32_0 : i32, i32, i32
  }
  func.func @transform_1(%arg0: i32) -> (i32, i32) {
    %c0_i32 = arith.constant 0 : i32
    %c0_i32_0 = arith.constant 0 : i32
    %c0_i32_1 = arith.constant 0 : i32
    return %c0_i32, %c0_i32_0 : i32, i32
  }
  func.func @transform_2(%arg0: i32) -> (i32, i32) {
    %c0_i32 = arith.constant 0 : i32
    %c0_i32_0 = arith.constant 0 : i32
    %c0_i32_1 = arith.constant 0 : i32
    return %c0_i32, %c0_i32_0 : i32, i32
  }
  func.func @transform_3(%arg0: i32) -> (i32, i32) {
    %c0_i32 = arith.constant 0 : i32
    %c0_i32_0 = arith.constant 0 : i32
    %c0_i32_1 = arith.constant 0 : i32
    return %c0_i32, %c0_i32_0 : i32, i32
  }
  func.func @transform_4(%arg0: i32) -> (i32, i32, i32) {
    %c0_i32 = arith.constant 0 : i32
    %c0_i32_0 = arith.constant 0 : i32
    %c0_i32_1 = arith.constant 0 : i32
    return %arg0, %c0_i32, %c0_i32_0 : i32, i32, i32
  }
}

</mosaic_0001>

<llo_original>
// kernel: tpu_custom_call.1
$region0: #{tpu_custom_call.1}
  #allocation0 [shape = 'u32[]', space=smem, size = 0x4, offset = 0x4, fixed_abs, tag = 'smem constant byte address 0x4 - core index']
  #allocation1 [shape = 'u32[144,128]{1,0:T(1,128)}', space=vmem, size = 0x12000, scoped, tag = 'internal scratch']
  %s0 = inlined_call_operand.vmem [shape: bf16[2,800,27], index: 0, kind: input, shape index: {}]
  %s1 = inlined_call_operand.vmem [shape: bf16[27,64], index: 1, kind: input, shape index: {}]
  %s2 = inlined_call_operand.vmem [shape: f32[1,64], index: 2, kind: input, shape index: {}]
  %s3 = inlined_call_operand.vmem [shape: f32[1,64], index: 3, kind: input, shape index: {}]
  %s4 = inlined_call_operand.vmem [shape: bf16[2,196,64], index: 4, kind: output, shape index: {}]
  %s5 = sld [smem:[#allocation0]]
  $region49: #{tpu_custom_call.1} parent=0
    _
  %s7 = ssub.s32 1, %s5
  %s8 = scalar_select 0, %s7, %s5
  loop: start=0, step=1, limit=4
  $region2: #{tpu_custom_call.1} parent=0 // loop_pre_header
    _
  $region3: #{tpu_custom_call.1} parent=0 // loop_header
    %s10 = sphi 0, %s14
    %p11 = scmp.ge.s32.totalorder %s10, 4
    %s20 = sphi 0, %s22
    %s23 = sphi 0, %s20
    %s24 = sphi 0, %s23
    %s40 = sphi 0, %s24
    %s44 = sphi 0, %s44
    %s46 = sphi 0, %s44
    %s47 = sphi 0, %s46
    %s61 = sphi 0, %s47
    %s65 = sphi 0, %s65
    %s67 = sphi 0, %s65
    %s68 = sphi 0, %s67
    %s82 = sphi 0, %s68
    %s86 = sphi 0, %s86
    %s88 = sphi 0, %s86
    %s89 = sphi 0, %s88
    %s103 = sphi 0, %s89
    %s109 = sphi 0, %s111
    %s112 = sphi 0, %s109
    %s113 = sphi 0, %s112
    %s129 = sphi 0, %s113
  $region4: #{tpu_custom_call.1} parent=0 // loop_header_branch
    %13 = sbr.rel (%p11) target = $region8
  $region5: #{tpu_custom_call.1} parent=0 // loop_body
    %s15 = ssub.s32 %s10, 1
    %s16 = ssub.s32 %s10, 2
    %s17 = sadd.s32 %s10, 1
    %s18 = ssub.s32 %s10, %s17
    %p19 = scmp.eq.s32.totalorder %s18, 0
    %s21 = sadd.s32 %s20, 1
    %s22 = scalar_select %p19, %s20, %s21
    %p25 = pneg %p19
    %p26 = scmp.eq.s32.totalorder %s10, 1
    %p27 = por %p25, %p26
    %p28 = scmp.ne.s32.totalorder %s20, %s23
    %p29 = scmp.eq.s32.totalorder %s10, 0
    %p30 = por %p28, %p29
    %p31 = scmp.ne.s32.totalorder %s20, %s23
    %p32 = scmp.eq.s32.totalorder %s15, 1
    %p33 = por %p31, %p32
    %p34 = scmp.ne.s32.totalorder %s23, %s24
    %p35 = scmp.eq.s32.totalorder %s15, 0
    %p36 = por %p34, %p35
    %p37 = scmp.ne.s32.totalorder %s23, %s24
    %p38 = scmp.eq.s32.totalorder %s16, 1
    %p39 = por %p37, %p38
    %p41 = scmp.ne.s32.totalorder %s24, %s40
    %p42 = scmp.eq.s32.totalorder %s16, 0
    %p43 = por %p41, %p42
    %s45 = sadd.s32 %s44, 1
    %p48 = scmp.eq.s32.totalorder %s10, 1
    %p49 = scmp.ne.s32.totalorder %s44, %s46
    %p50 = scmp.eq.s32.totalorder %s10, 0
    %p51 = por %p49, %p50
    %p52 = scmp.ne.s32.totalorder %s44, %s46
    %p53 = scmp.eq.s32.totalorder %s15, 1
    %p54 = por %p52, %p53
    %p55 = scmp.ne.s32.totalorder %s46, %s47
    %p56 = scmp.eq.s32.totalorder %s15, 0
    %p57 = por %p55, %p56
    %p58 = scmp.ne.s32.totalorder %s46, %s47
    %p59 = scmp.eq.s32.totalorder %s16, 1
    %p60 = por %p58, %p59
    %p62 = scmp.ne.s32.totalorder %s47, %s61
    %p63 = scmp.eq.s32.totalorder %s16, 0
    %p64 = por %p62, %p63
    %s66 = sadd.s32 %s65, 1
    %p69 = scmp.eq.s32.totalorder %s10, 1
    %p70 = scmp.ne.s32.totalorder %s65, %s67
    %p71 = scmp.eq.s32.totalorder %s10, 0
    %p72 = por %p70, %p71
    %p73 = scmp.ne.s32.totalorder %s65, %s67
    %p74 = scmp.eq.s32.totalorder %s15, 1
    %p75 = por %p73, %p74
    %p76 = scmp.ne.s32.totalorder %s67, %s68
    %p77 = scmp.eq.s32.totalorder %s15, 0
    %p78 = por %p76, %p77
    %p79 = scmp.ne.s32.totalorder %s67, %s68
    %p80 = scmp.eq.s32.totalorder %s16, 1
    %p81 = por %p79, %p80
    %p83 = scmp.ne.s32.totalorder %s68, %s82
    %p84 = scmp.eq.s32.totalorder %s16, 0
    %p85 = por %p83, %p84
    %s87 = sadd.s32 %s86, 1
    %p90 = scmp.eq.s32.totalorder %s10, 1
    %p91 = scmp.ne.s32.totalorder %s86, %s88
    %p92 = scmp.eq.s32.totalorder %s10, 0
    %p93 = por %p91, %p92
    %p94 = scmp.ne.s32.totalorder %s86, %s88
    %p95 = scmp.eq.s32.totalorder %s15, 1
    %p96 = por %p94, %p95
    %p97 = scmp.ne.s32.totalorder %s88, %s89
    %p98 = scmp.eq.s32.totalorder %s15, 0
    %p99 = por %p97, %p98
    %p100 = scmp.ne.s32.totalorder %s88, %s89
    %p101 = scmp.eq.s32.totalorder %s16, 1
    %p102 = por %p100, %p101
    %p104 = scmp.ne.s32.totalorder %s89, %s103
    %p105 = scmp.eq.s32.totalorder %s16, 0
    %p106 = por %p104, %p105
    %s107 = ssub.s32 %s10, %s17
    %p108 = scmp.eq.s32.totalorder %s107, 0
    %s110 = sadd.s32 %s109, 1
    %s111 = scalar_select %p108, %s109, %s110
    %p114 = pneg %p108
    %p115 = scmp.eq.s32.totalorder %s10, 1
    %p116 = por %p114, %p115
    %p117 = scmp.ne.s32.totalorder %s109, %s112
    %p118 = scmp.eq.s32.totalorder %s10, 0
    %p119 = por %p117, %p118
    %p120 = scmp.ne.s32.totalorder %s109, %s112
    %p121 = scmp.eq.s32.totalorder %s15, 1
    %p122 = por %p120, %p121
    %p123 = scmp.ne.s32.totalorder %s112, %s113
    %p124 = scmp.eq.s32.totalorder %s15, 0
    %p125 = por %p123, %p124
    %p126 = scmp.ne.s32.totalorder %s112, %s113
    %p127 = scmp.eq.s32.totalorder %s16, 1
    %p128 = por %p126, %p127
    %p130 = scmp.ne.s32.totalorder %s113, %s129
    %p131 = scmp.eq.s32.totalorder %s16, 0
    %p132 = por %p130, %p131
    %p133 = scmp.le.s32.totalorder 1, %s10
    %p134 = scmp.lt.s32.totalorder %s10, 3
    %p135 = pnand %p133, %p134
    %p136 = pneg %p135
    // Predicated region
    $region9: #{tpu_custom_call.1} parent=5 // pred_check
      _
    $region10: #{tpu_custom_call.1} parent=5 // pred_check_branch
      %138 = sbr.rel (%p135) target = $region12
    $region11: #{tpu_custom_call.1} parent=5 // pred_region
      %s139 = ssub.s32 %s10, 1
      // Predicated region
      $region13: #{tpu_custom_call.1} parent=11 // pred_check
        %p140 = pneg %p57
      $region14: #{tpu_custom_call.1} parent=11 // pred_check_branch
        %142 = sbr.rel (%p140) target = $region16
      $region15: #{tpu_custom_call.1} parent=11 // pred_region
        _
      $region16: #{tpu_custom_call.1} parent=11 // pred_fallthru
        _
      // Predicated region
      $region17: #{tpu_custom_call.1} parent=11 // pred_check
        %p143 = pneg %p78
      $region18: #{tpu_custom_call.1} parent=11 // pred_check_branch
        %145 = sbr.rel (%p143) target = $region20
      $region19: #{tpu_custom_call.1} parent=11 // pred_region
        _
      $region20: #{tpu_custom_call.1} parent=11 // pred_fallthru
        _
      // Predicated region
      $region21: #{tpu_custom_call.1} parent=11 // pred_check
        %p146 = pneg %p99
      $region22: #{tpu_custom_call.1} parent=11 // pred_check_branch
        %148 = sbr.rel (%p146) target = $region24
      $region23: #{tpu_custom_call.1} parent=11 // pred_region
        _
      $region24: #{tpu_custom_call.1} parent=11 // pred_fallthru
        _
    $region12: #{tpu_custom_call.1} parent=5 // pred_fallthru
      _
    %p149 = scmp.lt.s32.totalorder %s10, 2
    // Predicated region
    $region25: #{tpu_custom_call.1} parent=5 // pred_check
      %p150 = pneg %p149
    $region26: #{tpu_custom_call.1} parent=5 // pred_check_branch
      %152 = sbr.rel (%p150) target = $region28
    $region27: #{tpu_custom_call.1} parent=5 // pred_region
      // Predicated region
      $region29: #{tpu_custom_call.1} parent=27 // pred_check
        %p153 = pneg %p30
      $region30: #{tpu_custom_call.1} parent=27 // pred_check_branch
        %155 = sbr.rel (%p153) target = $region32
      $region31: #{tpu_custom_call.1} parent=27 // pred_region
        %p156 = scmp.lt.s32.totalorder %s10, 1
        %s157 = scalar_select %p156, %s10, 1
        %s158 = smul.addr %s157, 100
        %s159 = smul.addr %s158, 4
        %s160 = scalar_lea.vmem %s0, %s159
      $region32: #{tpu_custom_call.1} parent=27 // pred_fallthru
        _
    $region28: #{tpu_custom_call.1} parent=5 // pred_fallthru
      _
    %p161 = scmp.le.s32.totalorder 1, %s10
    %p162 = scmp.lt.s32.totalorder %s10, 3
    %p163 = pnand %p161, %p162
    %p164 = pneg %p163
    // Predicated region
    $region33: #{tpu_custom_call.1} parent=5 // pred_check
      _
    $region34: #{tpu_custom_call.1} parent=5 // pred_check_branch
      %166 = sbr.rel (%p163) target = $region36
    $region35: #{tpu_custom_call.1} parent=5 // pred_region
      %s167 = ssub.s32 %s10, 1
      %p168 = scmp.lt.s32.totalorder %s15, 1
      %s169 = scalar_select %p168, %s15, 1
      %s170 = smul.addr %s169, 100
      %s171 = smul.addr %s170, 4
      %s172 = scalar_lea.vmem %s0, %s171
      %p173 = pneg %p36
      %p174 = pneg %p33
      %p175 = pneg %p57
      %p176 = pneg %p54
      %p177 = pneg %p78
      %p178 = pneg %p75
      %p179 = pneg %p99
      %p180 = pneg %p96
      %p181 = pneg %p125
      %p182 = pneg %p122
      %p183 = scmp.lt.s32.totalorder %s15, 1
      %s184 = scalar_select %p183, %s15, 1
      %s185 = smul.addr %s184, 25
      %s186 = smul.addr %s185, 4
      %s187 = scalar_lea.vmem %s4, %s186
      %p188 = scmp.lt.s32.totalorder %s15, 1
      %s189 = scalar_select %p188, %s15, 1
      %s190 = smul.addr %s189, 100
      %s191 = smul.addr %s190, 4
      %s192 = scalar_lea.vmem %s0, %s191
      %p193 = scmp.lt.s32.totalorder %s15, 1
      %s194 = scalar_select %p193, %s15, 1
      %s195 = smul.addr %s194, 25
      %s196 = smul.addr %s195, 4
      %s197 = scalar_lea.vmem %s4, %s196
      %v199 = vld [vmem:[%s192] sm:$0xf]
      %v200 = vld [vmem:[%s192 + $0x4] sm:$0xf]
      %v201 = vld [vmem:[%s192 + $0x8] sm:$0xf]
      %v202 = vld [vmem:[%s192 + $0xc] sm:$0xf]
      %v203 = vld [vmem:[%s192 + $0x10] sm:$0xf]
      %v204 = vld [vmem:[%s192 + $0x14] sm:$0xf]
      %v205 = vld [vmem:[%s192 + $0x18] sm:$0xf]
      %v206 = vld [vmem:[%s192 + $0x1c] sm:$0xf]
      %v207 = vld [vmem:[%s192 + $0x20] sm:$0xf]
      %v208 = vld [vmem:[%s192 + $0x24] sm:$0xf]
      %v209 = vld [vmem:[%s192 + $0x28] sm:$0xf]
      %v210 = vld [vmem:[%s192 + $0x2c] sm:$0xf]
      %v211 = vld [vmem:[%s192 + $0x30] sm:$0xf]
      %v212 = vld [vmem:[%s192 + $0x34] sm:$0xf]
      %v213 = vld [vmem:[%s192 + $0x38] sm:$0xf]
      %v214 = vld [vmem:[%s192 + $0x3c] sm:$0xf]
      %v215 = vld [vmem:[%s192 + $0x40] sm:$0xf]
      %v216 = vld [vmem:[%s192 + $0x44] sm:$0xf]
      %v217 = vld [vmem:[%s192 + $0x48] sm:$0xf]
      %v218 = vld [vmem:[%s192 + $0x4c] sm:$0xf]
      %v219 = vld [vmem:[%s192 + $0x50] sm:$0xf]
      %v220 = vld [vmem:[%s192 + $0x54] sm:$0xf]
      %v221 = vld [vmem:[%s192 + $0x58] sm:$0xf]
      %v222 = vld [vmem:[%s192 + $0x5c] sm:$0xf]
      %v223 = vld [vmem:[%s192 + $0x60] sm:$0xf]
      %v224 = vld [vmem:[%s192 + $0x64] sm:$0xf]
      %v225 = vld [vmem:[%s192 + $0x68] sm:$0xf]
      %v226 = vld [vmem:[%s192 + $0x6c] sm:$0xf]
      %v227 = vld [vmem:[%s192 + $0x70] sm:$0xf]
      %v228 = vld [vmem:[%s192 + $0x74] sm:$0xf]
      %v229 = vld [vmem:[%s192 + $0x78] sm:$0xf]
      %v230 = vld [vmem:[%s192 + $0x7c] sm:$0xf]
      %v231 = vld [vmem:[%s192 + $0x80] sm:$0xf]
      %v232 = vld [vmem:[%s192 + $0x84] sm:$0xf]
      %v233 = vld [vmem:[%s192 + $0x88] sm:$0xf]
      %v234 = vld [vmem:[%s192 + $0x8c] sm:$0xf]
      %v235 = vld [vmem:[%s192 + $0x90] sm:$0xf]
      %v236 = vld [vmem:[%s192 + $0x94] sm:$0xf]
      %v237 = vld [vmem:[%s192 + $0x98] sm:$0xf]
      %v238 = vld [vmem:[%s192 + $0x9c] sm:$0xf]
      %v239 = vld [vmem:[%s192 + $0xa0] sm:$0xf]
      %v240 = vld [vmem:[%s192 + $0xa4] sm:$0xf]
      %v241 = vld [vmem:[%s192 + $0xa8] sm:$0xf]
      %v242 = vld [vmem:[%s192 + $0xac] sm:$0xf]
      %v243 = vld [vmem:[%s192 + $0xb0] sm:$0xf]
      %v244 = vld [vmem:[%s192 + $0xb4] sm:$0xf]
      %v245 = vld [vmem:[%s192 + $0xb8] sm:$0xf]
      %v246 = vld [vmem:[%s192 + $0xbc] sm:$0xf]
      %v247 = vld [vmem:[%s192 + $0xc0] sm:$0xf]
      %v248 = vld [vmem:[%s192 + $0xc4] sm:$0xf]
      %v249 = vld [vmem:[%s192 + $0xc8] sm:$0xf]
      %v250 = vld [vmem:[%s192 + $0xcc] sm:$0xf]
      %v251 = vld [vmem:[%s192 + $0xd0] sm:$0xf]
      %v252 = vld [vmem:[%s192 + $0xd4] sm:$0xf]
      %v253 = vld [vmem:[%s192 + $0xd8] sm:$0xf]
      %v254 = vld [vmem:[%s192 + $0xdc] sm:$0xf]
      %v255 = vld [vmem:[%s192 + $0xe0] sm:$0xf]
      %v256 = vld [vmem:[%s192 + $0xe4] sm:$0xf]
      %v257 = vld [vmem:[%s192 + $0xe8] sm:$0xf]
      %v258 = vld [vmem:[%s192 + $0xec] sm:$0xf]
      %v259 = vld [vmem:[%s192 + $0xf0] sm:$0xf]
      %v260 = vld [vmem:[%s192 + $0xf4] sm:$0xf]
      %v261 = vld [vmem:[%s192 + $0xf8] sm:$0xf]
      %v262 = vld [vmem:[%s192 + $0xfc] sm:$0xf]
      %v263 = vld [vmem:[%s192 + $0x100] sm:$0xf]
      %v264 = vld [vmem:[%s192 + $0x104] sm:$0xf]
      %v265 = vld [vmem:[%s192 + $0x108] sm:$0xf]
      %v266 = vld [vmem:[%s192 + $0x10c] sm:$0xf]
      %v267 = vld [vmem:[%s192 + $0x110] sm:$0xf]
      %v268 = vld [vmem:[%s192 + $0x114] sm:$0xf]
      %v269 = vld [vmem:[%s192 + $0x118] sm:$0xf]
      %v270 = vld [vmem:[%s192 + $0x11c] sm:$0xf]
      %v271 = vld [vmem:[%s192 + $0x120] sm:$0xf]
      %v272 = vld [vmem:[%s192 + $0x124] sm:$0xf]
      %v273 = vld [vmem:[%s192 + $0x128] sm:$0xf]
      %v274 = vld [vmem:[%s192 + $0x12c] sm:$0xf]
      %v275 = vld [vmem:[%s192 + $0x130] sm:$0xf]
      %v276 = vld [vmem:[%s192 + $0x134] sm:$0xf]
      %v277 = vld [vmem:[%s192 + $0x138] sm:$0xf]
      %v278 = vld [vmem:[%s192 + $0x13c] sm:$0xf]
      %v279 = vld [vmem:[%s192 + $0x140] sm:$0xf]
      %v280 = vld [vmem:[%s192 + $0x144] sm:$0xf]
      %v281 = vld [vmem:[%s192 + $0x148] sm:$0xf]
      %v282 = vld [vmem:[%s192 + $0x14c] sm:$0xf]
      %v283 = vld [vmem:[%s192 + $0x150] sm:$0xf]
      %v284 = vld [vmem:[%s192 + $0x154] sm:$0xf]
      %v285 = vld [vmem:[%s192 + $0x158] sm:$0xf]
      %v286 = vld [vmem:[%s192 + $0x15c] sm:$0xf]
      %v287 = vld [vmem:[%s192 + $0x160] sm:$0xf]
      %v288 = vld [vmem:[%s192 + $0x164] sm:$0xf]
      %v289 = vld [vmem:[%s192 + $0x168] sm:$0xf]
      %v290 = vld [vmem:[%s192 + $0x16c] sm:$0xf]
      %v291 = vld [vmem:[%s192 + $0x170] sm:$0xf]
      %v292 = vld [vmem:[%s192 + $0x174] sm:$0xf]
      %v293 = vld [vmem:[%s192 + $0x178] sm:$0xf]
      %v294 = vld [vmem:[%s192 + $0x17c] sm:$0xf]
      %v295 = vld [vmem:[%s192 + $0x180] sm:$0xf]
      %v296 = vld [vmem:[%s192 + $0x184] sm:$0xf]
      %v297 = vld [vmem:[%s192 + $0x188] sm:$0xf]
      %v298 = vld [vmem:[%s192 + $0x18c] sm:$0xf]
      %v299 = vld [vmem:[%s1] sm:$0xf]
      %v300 = vld [vmem:[%s1 + $0x4] sm:$0xf]
      %v301 = vld [vmem:[%s1 + $0x8] sm:$0xf]
      %v302 = vld [vmem:[%s1 + $0xc] sm:$0x3]
      %v403 = vunpack.c.l.b16 %v199
      %v404 = vunpack.c.l.b16 %v200
      %v405 = vunpack.c.l.b16 %v201
      %v406 = vunpack.c.l.b16 %v202
      %v407 = vunpack.c.l.b16 %v203
      %v408 = vunpack.c.l.b16 %v204
      %v409 = vunpack.c.l.b16 %v205
      %v410 = vunpack.c.l.b16 %v206
      %v411 = vunpack.c.l.b16 %v207
      %v412 = vunpack.c.l.b16 %v208
      %v413 = vunpack.c.l.b16 %v209
      %v414 = vunpack.c.l.b16 %v210
      %v415 = vunpack.c.l.b16 %v211
      %v416 = vunpack.c.l.b16 %v212
      %v417 = vunpack.c.l.b16 %v213
      %v418 = vunpack.c.l.b16 %v214
      %v419 = vunpack.c.l.b16 %v215
      %v420 = vunpack.c.l.b16 %v216
      %v421 = vunpack.c.l.b16 %v217
      %v422 = vunpack.c.l.b16 %v218
      %v423 = vunpack.c.l.b16 %v219
      %v424 = vunpack.c.l.b16 %v220
      %v425 = vunpack.c.l.b16 %v221
      %v426 = vunpack.c.l.b16 %v222
      %v427 = vunpack.c.l.b16 %v223
      %v428 = vunpack.c.l.b16 %v224
      %v429 = vunpack.c.l.b16 %v225
      %v430 = vunpack.c.l.b16 %v226
      %v431 = vunpack.c.l.b16 %v227
      %v432 = vunpack.c.l.b16 %v228
      %v433 = vunpack.c.l.b16 %v229
      %v434 = vunpack.c.l.b16 %v230
      %v435 = vunpack.c.l.b16 %v231
      %v436 = vunpack.c.l.b16 %v232
      %v437 = vunpack.c.l.b16 %v233
      %v438 = vunpack.c.l.b16 %v234
      %v439 = vunpack.c.l.b16 %v235
      %v440 = vunpack.c.l.b16 %v236
      %v441 = vunpack.c.l.b16 %v237
      %v442 = vunpack.c.l.b16 %v238
      %v443 = vunpack.c.l.b16 %v239
      %v444 = vunpack.c.l.b16 %v240
      %v445 = vunpack.c.l.b16 %v241
      %v446 = vunpack.c.l.b16 %v242
      %v447 = vunpack.c.l.b16 %v243
      %v448 = vunpack.c.l.b16 %v244
      %v449 = vunpack.c.l.b16 %v245
      %v450 = vunpack.c.l.b16 %v246
      %v451 = vunpack.c.l.b16 %v247
      %v452 = vunpack.c.l.b16 %v248
      %v453 = vunpack.c.l.b16 %v249
      %v454 = vunpack.c.l.b16 %v250
      %v455 = vunpack.c.l.b16 %v251
      %v456 = vunpack.c.l.b16 %v252
      %v457 = vunpack.c.l.b16 %v253
      %v458 = vunpack.c.l.b16 %v254
      %v459 = vunpack.c.l.b16 %v255
      %v460 = vunpack.c.l.b16 %v256
      %v461 = vunpack.c.l.b16 %v257
      %v462 = vunpack.c.l.b16 %v258
      %v463 = vunpack.c.l.b16 %v259
      %v464 = vunpack.c.l.b16 %v260
      %v465 = vunpack.c.l.b16 %v261
      %v466 = vunpack.c.l.b16 %v262
      %v467 = vunpack.c.l.b16 %v263
      %v468 = vunpack.c.l.b16 %v264
      %v469 = vunpack.c.l.b16 %v265
      %v470 = vunpack.c.l.b16 %v266
      %v471 = vunpack.c.l.b16 %v267
      %v472 = vunpack.c.l.b16 %v268
      %v473 = vunpack.c.l.b16 %v269
      %v474 = vunpack.c.l.b16 %v270
      %v475 = vunpack.c.l.b16 %v271
      %v476 = vunpack.c.l.b16 %v272
      %v477 = vunpack.c.l.b16 %v273
      %v478 = vunpack.c.l.b16 %v274
      %v479 = vunpack.c.l.b16 %v275
      %v480 = vunpack.c.l.b16 %v276
      %v481 = vunpack.c.l.b16 %v277
      %v482 = vunpack.c.l.b16 %v278
      %v483 = vunpack.c.l.b16 %v279
      %v484 = vunpack.c.l.b16 %v280
      %v485 = vunpack.c.l.b16 %v281
      %v486 = vunpack.c.l.b16 %v282
      %v487 = vunpack.c.l.b16 %v283
      %v488 = vunpack.c.l.b16 %v284
      %v489 = vunpack.c.l.b16 %v285
      %v490 = vunpack.c.l.b16 %v286
      %v491 = vunpack.c.l.b16 %v287
      %v492 = vunpack.c.l.b16 %v288
      %v493 = vunpack.c.l.b16 %v289
      %v494 = vunpack.c.l.b16 %v290
      %v495 = vunpack.c.l.b16 %v291
      %v496 = vunpack.c.l.b16 %v292
      %v497 = vunpack.c.l.b16 %v293
      %v498 = vunpack.c.l.b16 %v294
      %v499 = vunpack.c.l.b16 %v295
      %v500 = vunpack.c.l.b16 %v296
      %v501 = vunpack.c.l.b16 %v297
      %v502 = vunpack.c.l.b16 %v298
      %v503 = vpack.c.b16 %v404, %v403
      %v504 = vpack.c.b16 %v406, %v405
      %v505 = vpack.c.b16 %v408, %v407
      %v506 = vpack.c.b16 %v410, %v409
      %v507 = vpack.c.b16 %v412, %v411
      %v508 = vpack.c.b16 %v414, %v413
      %v509 = vpack.c.b16 %v416, %v415
      %v510 = vpack.c.b16 %v418, %v417
      %v511 = vpack.c.b16 %v420, %v419
      %v512 = vpack.c.b16 %v422, %v421
      %v513 = vpack.c.b16 %v424, %v423
      %v514 = vpack.c.b16 %v426, %v425
      %v515 = vpack.c.b16 %v428, %v427
      %v516 = vpack.c.b16 %v430, %v429
      %v517 = vpack.c.b16 %v432, %v431
      %v518 = vpack.c.b16 %v434, %v433
      %v519 = vpack.c.b16 %v436, %v435
      %v520 = vpack.c.b16 %v438, %v437
      %v521 = vpack.c.b16 %v440, %v439
      %v522 = vpack.c.b16 %v442, %v441
      %v523 = vpack.c.b16 %v444, %v443
      %v524 = vpack.c.b16 %v446, %v445
      %v525 = vpack.c.b16 %v448, %v447
      %v526 = vpack.c.b16 %v450, %v449
      %v527 = vpack.c.b16 %v452, %v451
      %v528 = vpack.c.b16 %v454, %v453
      %v529 = vpack.c.b16 %v456, %v455
      %v530 = vpack.c.b16 %v458, %v457
      %v531 = vpack.c.b16 %v460, %v459
      %v532 = vpack.c.b16 %v462, %v461
      %v533 = vpack.c.b16 %v464, %v463
      %v534 = vpack.c.b16 %v466, %v465
      %v535 = vpack.c.b16 %v468, %v467
      %v536 = vpack.c.b16 %v470, %v469
      %v537 = vpack.c.b16 %v472, %v471
      %v538 = vpack.c.b16 %v474, %v473
      %v539 = vpack.c.b16 %v476, %v475
      %v540 = vpack.c.b16 %v478, %v477
      %v541 = vpack.c.b16 %v480, %v479
      %v542 = vpack.c.b16 %v482, %v481
      %v543 = vpack.c.b16 %v484, %v483
      %v544 = vpack.c.b16 %v486, %v485
      %v545 = vpack.c.b16 %v488, %v487
      %v546 = vpack.c.b16 %v490, %v489
      %v547 = vpack.c.b16 %v492, %v491
      %v548 = vpack.c.b16 %v494, %v493
      %v549 = vpack.c.b16 %v496, %v495
      %v550 = vpack.c.b16 %v498, %v497
      %v551 = vpack.c.b16 %v500, %v499
      %v552 = vpack.c.b16 %v502, %v501
      %v557 = vunpack.c.l.b16 %v299
      %v558 = vunpack.c.l.b16 %v300
      %v559 = vunpack.c.l.b16 %v301
      %v560 = vunpack.c.l.b16 %v302
      %v561 = vpack.c.b16 %v558, %v557
      %v562 = vpack.c.b16 %v560, %v559
      %vm564 = vcmask 220160
      %v566 = vsel %vm564, %v503, 0
      %v569 = vsel %vm564, %v504, 0
      %v572 = vsel %vm564, %v505, 0
      %v575 = vsel %vm564, %v506, 0
      %v578 = vsel %vm564, %v507, 0
      %v581 = vsel %vm564, %v508, 0
      %v584 = vsel %vm564, %v509, 0
      %v587 = vsel %vm564, %v510, 0
      %v590 = vsel %vm564, %v511, 0
      %v593 = vsel %vm564, %v512, 0
      %v596 = vsel %vm564, %v513, 0
      %v599 = vsel %vm564, %v514, 0
      %v602 = vsel %vm564, %v515, 0
      %v605 = vsel %vm564, %v516, 0
      %v608 = vsel %vm564, %v517, 0
      %v611 = vsel %vm564, %v518, 0
      %v614 = vsel %vm564, %v519, 0
      %v617 = vsel %vm564, %v520, 0
      %v620 = vsel %vm564, %v521, 0
      %v623 = vsel %vm564, %v522, 0
      %v626 = vsel %vm564, %v523, 0
      %v629 = vsel %vm564, %v524, 0
      %v632 = vsel %vm564, %v525, 0
      %v635 = vsel %vm564, %v526, 0
      %v638 = vsel %vm564, %v527, 0
      %v641 = vsel %vm564, %v528, 0
      %v644 = vsel %vm564, %v529, 0
      %v647 = vsel %vm564, %v530, 0
      %v650 = vsel %vm564, %v531, 0
      %v653 = vsel %vm564, %v532, 0
      %v656 = vsel %vm564, %v533, 0
      %v659 = vsel %vm564, %v534, 0
      %v662 = vsel %vm564, %v535, 0
      %v665 = vsel %vm564, %v536, 0
      %v668 = vsel %vm564, %v537, 0
      %v671 = vsel %vm564, %v538, 0
      %v674 = vsel %vm564, %v539, 0
      %v677 = vsel %vm564, %v540, 0
      %v680 = vsel %vm564, %v541, 0
      %v683 = vsel %vm564, %v542, 0
      %v686 = vsel %vm564, %v543, 0
      %v689 = vsel %vm564, %v544, 0
      %v692 = vsel %vm564, %v545, 0
      %v695 = vsel %vm564, %v546, 0
      %v698 = vsel %vm564, %v547, 0
      %v701 = vsel %vm564, %v548, 0
      %v704 = vsel %vm564, %v549, 0
      %v707 = vsel %vm564, %v550, 0
      %v710 = vsel %vm564, %v551, 0
      %v713 = vsel %vm564, %v552, 0
      %vm715 = vcmask 1044480
      %vm716 = vcmask 1045504
      %v717 = vsel %vm715, 4294967295, 65535
      %v718 = vsel %vm716, %v717, 0
      %v720 = vand.u32 %v562, %v718
      %722 = vmatprep.subr.bf16.mxu0 0
      %723 = vmatpush1.bf16.msra.mxu0 0
      %724 = vmatprep.subr.bf16.mxu0 0
      %725 = vmatpush1.bf16.msra.mxu0 0
      %726 = vmatprep.subr.bf16.mxu0 0
      %727 = vmatpush1.bf16.msra.mxu0 0
      %728 = vmatprep.subr.bf16.mxu0 0
      %729 = vmatpush1.bf16.msra.mxu0 0
      %730 = vmatprep.subr.bf16.mxu0 0
      %731 = vmatpush1.bf16.msra.mxu0 0
      %732 = vmatprep.subr.bf16.mxu0 0
      %733 = vmatpush1.bf16.msra.mxu0 0
      %734 = vmatprep.subr.bf16.mxu0 0
      %735 = vmatpush1.bf16.msra.mxu0 %v720
      %736 = vmatprep.subr.bf16.mxu0 0
      %737 = vmatpush1.bf16.msra.mxu0 %v561
      %738 = vmatprep.subr.bf16.mxu0 0
      %739 = vmatpush2.bf16.msra.mxu0 0
      %740 = vmatprep.subr.bf16.mxu0 0
      %741 = vmatpush2.bf16.msra.mxu0 0
      %742 = vmatprep.subr.bf16.mxu0 0
      %743 = vmatpush2.bf16.msra.mxu0 0
      %744 = vmatprep.subr.bf16.mxu0 0
      %745 = vmatpush2.bf16.msra.mxu0 0
      %746 = vmatprep.subr.bf16.mxu0 0
      %747 = vmatpush2.bf16.msra.mxu0 0
      %748 = vmatprep.subr.bf16.mxu0 0
      %749 = vmatpush2.bf16.msra.mxu0 0
      %750 = vmatprep.subr.bf16.mxu0 0
      %751 = vmatpush2.bf16.msra.mxu0 0
      %752 = vmatprep.subr.bf16.mxu0 0
      %753 = vmatpush2.bf16.msra.mxu0 0
      %754 = vmatprep.mubr.bf16.mxu0 0
      %755 = vmatmul.mubr.bf16.gmra.mxu0 %v566
      %v756 = vpop.f32.mrf.mxu0
      %v757 = vadd.f32 0.0, %v756
      %v758 = vpop.f32.mrf.mxu0
      %v759 = vpop.f32.mrf.mxu0
      %v760 = vadd.f32 0.0, %v759
      %v761 = vpop.f32.mrf.mxu0
      %762 = vmatprep.mubr.bf16.mxu0 0
      %763 = vmatmul.mubr.bf16.gmra.mxu0 %v569
      %v764 = vpop.f32.mrf.mxu0
      %v765 = vadd.f32 0.0, %v764
      %v766 = vpop.f32.mrf.mxu0
      %v767 = vpop.f32.mrf.mxu0
      %v768 = vadd.f32 0.0, %v767
      %v769 = vpop.f32.mrf.mxu0
      %770 = vmatprep.mubr.bf16.mxu0 0
      %771 = vmatmul.mubr.bf16.gmra.mxu0 %v572
      %v772 = vpop.f32.mrf.mxu0
      %v773 = vadd.f32 0.0, %v772
      %v774 = vpop.f32.mrf.mxu0
      %v775 = vpop.f32.mrf.mxu0
      %v776 = vadd.f32 0.0, %v775
      %v777 = vpop.f32.mrf.mxu0
      %778 = vmatprep.mubr.bf16.mxu0 0
      %779 = vmatmul.mubr.bf16.gmra.mxu0 %v575
      %v780 = vpop.f32.mrf.mxu0
      %v781 = vadd.f32 0.0, %v780
      %v782 = vpop.f32.mrf.mxu0
      %v783 = vpop.f32.mrf.mxu0
      %v784 = vadd.f32 0.0, %v783
      %v785 = vpop.f32.mrf.mxu0
      %786 = vmatprep.mubr.bf16.mxu0 0
      %787 = vmatmul.mubr.bf16.gmra.mxu0 %v578
      %v788 = vpop.f32.mrf.mxu0
      %v789 = vadd.f32 0.0, %v788
      %v790 = vpop.f32.mrf.mxu0
      %v791 = vpop.f32.mrf.mxu0
      %v792 = vadd.f32 0.0, %v791
      %v793 = vpop.f32.mrf.mxu0
      %794 = vmatprep.mubr.bf16.mxu0 0
      %795 = vmatmul.mubr.bf16.gmra.mxu0 %v581
      %v796 = vpop.f32.mrf.mxu0
      %v797 = vadd.f32 0.0, %v796
      %v798 = vpop.f32.mrf.mxu0
      %v799 = vpop.f32.mrf.mxu0
      %v800 = vadd.f32 0.0, %v799
      %v801 = vpop.f32.mrf.mxu0
      %802 = vmatprep.mubr.bf16.mxu0 0
      %803 = vmatmul.mubr.bf16.gmra.mxu0 %v584
      %v804 = vpop.f32.mrf.mxu0
      %v805 = vadd.f32 0.0, %v804
      %v806 = vpop.f32.mrf.mxu0
      %v807 = vpop.f32.mrf.mxu0
      %v808 = vadd.f32 0.0, %v807
      %v809 = vpop.f32.mrf.mxu0
      %810 = vmatprep.mubr.bf16.mxu0 0
      %811 = vmatmul.mubr.bf16.gmra.mxu0 %v587
      %v812 = vpop.f32.mrf.mxu0
      %v813 = vadd.f32 0.0, %v812
      %v814 = vpop.f32.mrf.mxu0
      %v815 = vpop.f32.mrf.mxu0
      %v816 = vadd.f32 0.0, %v815
      %v817 = vpop.f32.mrf.mxu0
      %818 = vmatprep.mubr.bf16.mxu0 0
      %819 = vmatmul.mubr.bf16.gmra.mxu0 %v590
      %v820 = vpop.f32.mrf.mxu0
      %v821 = vadd.f32 0.0, %v820
      %v822 = vpop.f32.mrf.mxu0
      %v823 = vpop.f32.mrf.mxu0
      %v824 = vadd.f32 0.0, %v823
      %v825 = vpop.f32.mrf.mxu0
      %826 = vmatprep.mubr.bf16.mxu0 0
      %827 = vmatmul.mubr.bf16.gmra.mxu0 %v593
      %v828 = vpop.f32.mrf.mxu0
      %v829 = vadd.f32 0.0, %v828
      %v830 = vpop.f32.mrf.mxu0
      %v831 = vpop.f32.mrf.mxu0
      %v832 = vadd.f32 0.0, %v831
      %v833 = vpop.f32.mrf.mxu0
      %834 = vmatprep.mubr.bf16.mxu0 0
      %835 = vmatmul.mubr.bf16.gmra.mxu0 %v596
      %v836 = vpop.f32.mrf.mxu0
      %v837 = vadd.f32 0.0, %v836
      %v838 = vpop.f32.mrf.mxu0
      %v839 = vpop.f32.mrf.mxu0
      %v840 = vadd.f32 0.0, %v839
      %v841 = vpop.f32.mrf.mxu0
      %842 = vmatprep.mubr.bf16.mxu0 0
      %843 = vmatmul.mubr.bf16.gmra.mxu0 %v599
      %v844 = vpop.f32.mrf.mxu0
      %v845 = vadd.f32 0.0, %v844
      %v846 = vpop.f32.mrf.mxu0
      %v847 = vpop.f32.mrf.mxu0
      %v848 = vadd.f32 0.0, %v847
      %v849 = vpop.f32.mrf.mxu0
      %850 = vmatprep.mubr.bf16.mxu0 0
      %851 = vmatmul.mubr.bf16.gmra.mxu0 %v602
      %v852 = vpop.f32.mrf.mxu0
      %v853 = vadd.f32 0.0, %v852
      %v854 = vpop.f32.mrf.mxu0
      %v855 = vpop.f32.mrf.mxu0
      %v856 = vadd.f32 0.0, %v855
      %v857 = vpop.f32.mrf.mxu0
      %858 = vmatprep.mubr.bf16.mxu0 0
      %859 = vmatmul.mubr.bf16.gmra.mxu0 %v605
      %v860 = vpop.f32.mrf.mxu0
      %v861 = vadd.f32 0.0, %v860
      %v862 = vpop.f32.mrf.mxu0
      %v863 = vpop.f32.mrf.mxu0
      %v864 = vadd.f32 0.0, %v863
      %v865 = vpop.f32.mrf.mxu0
      %866 = vmatprep.mubr.bf16.mxu0 0
      %867 = vmatmul.mubr.bf16.gmra.mxu0 %v608
      %v868 = vpop.f32.mrf.mxu0
      %v869 = vadd.f32 0.0, %v868
      %v870 = vpop.f32.mrf.mxu0
      %v871 = vpop.f32.mrf.mxu0
      %v872 = vadd.f32 0.0, %v871
      %v873 = vpop.f32.mrf.mxu0
      %874 = vmatprep.mubr.bf16.mxu0 0
      %875 = vmatmul.mubr.bf16.gmra.mxu0 %v611
      %v876 = vpop.f32.mrf.mxu0
      %v877 = vadd.f32 0.0, %v876
      %v878 = vpop.f32.mrf.mxu0
      %v879 = vpop.f32.mrf.mxu0
      %v880 = vadd.f32 0.0, %v879
      %v881 = vpop.f32.mrf.mxu0
      %882 = vmatprep.mubr.bf16.mxu0 0
      %883 = vmatmul.mubr.bf16.gmra.mxu0 %v614
      %v884 = vpop.f32.mrf.mxu0
      %v885 = vadd.f32 0.0, %v884
      %v886 = vpop.f32.mrf.mxu0
      %v887 = vpop.f32.mrf.mxu0
      %v888 = vadd.f32 0.0, %v887
      %v889 = vpop.f32.mrf.mxu0
      %890 = vmatprep.mubr.bf16.mxu0 0
      %891 = vmatmul.mubr.bf16.gmra.mxu0 %v617
      %v892 = vpop.f32.mrf.mxu0
      %v893 = vadd.f32 0.0, %v892
      %v894 = vpop.f32.mrf.mxu0
      %v895 = vpop.f32.mrf.mxu0
      %v896 = vadd.f32 0.0, %v895
      %v897 = vpop.f32.mrf.mxu0
      %898 = vmatprep.mubr.bf16.mxu0 0
      %899 = vmatmul.mubr.bf16.gmra.mxu0 %v620
      %v900 = vpop.f32.mrf.mxu0
      %v901 = vadd.f32 0.0, %v900
      %v902 = vpop.f32.mrf.mxu0
      %v903 = vpop.f32.mrf.mxu0
      %v904 = vadd.f32 0.0, %v903
      %v905 = vpop.f32.mrf.mxu0
      %906 = vmatprep.mubr.bf16.mxu0 0
      %907 = vmatmul.mubr.bf16.gmra.mxu0 %v623
      %v908 = vpop.f32.mrf.mxu0
      %v909 = vadd.f32 0.0, %v908
      %v910 = vpop.f32.mrf.mxu0
      %v911 = vpop.f32.mrf.mxu0
      %v912 = vadd.f32 0.0, %v911
      %v913 = vpop.f32.mrf.mxu0
      %914 = vmatprep.mubr.bf16.mxu0 0
      %915 = vmatmul.mubr.bf16.gmra.mxu0 %v626
      %v916 = vpop.f32.mrf.mxu0
      %v917 = vadd.f32 0.0, %v916
      %v918 = vpop.f32.mrf.mxu0
      %v919 = vpop.f32.mrf.mxu0
      %v920 = vadd.f32 0.0, %v919
      %v921 = vpop.f32.mrf.mxu0
      %922 = vmatprep.mubr.bf16.mxu0 0
      %923 = vmatmul.mubr.bf16.gmra.mxu0 %v629
      %v924 = vpop.f32.mrf.mxu0
      %v925 = vadd.f32 0.0, %v924
      %v926 = vpop.f32.mrf.mxu0
      %v927 = vpop.f32.mrf.mxu0
      %v928 = vadd.f32 0.0, %v927
      %v929 = vpop.f32.mrf.mxu0
      %930 = vmatprep.mubr.bf16.mxu0 0
      %931 = vmatmul.mubr.bf16.gmra.mxu0 %v632
      %v932 = vpop.f32.mrf.mxu0
      %v933 = vadd.f32 0.0, %v932
      %v934 = vpop.f32.mrf.mxu0
      %v935 = vpop.f32.mrf.mxu0
      %v936 = vadd.f32 0.0, %v935
      %v937 = vpop.f32.mrf.mxu0
      %938 = vmatprep.mubr.bf16.mxu0 0
      %939 = vmatmul.mubr.bf16.gmra.mxu0 %v635
      %v940 = vpop.f32.mrf.mxu0
      %v941 = vadd.f32 0.0, %v940
      %v942 = vpop.f32.mrf.mxu0
      %v943 = vpop.f32.mrf.mxu0
      %v944 = vadd.f32 0.0, %v943
      %v945 = vpop.f32.mrf.mxu0
      %946 = vmatprep.mubr.bf16.mxu0 0
      %947 = vmatmul.mubr.bf16.gmra.mxu0 %v638
      %v948 = vpop.f32.mrf.mxu0
      %v949 = vadd.f32 0.0, %v948
      %v950 = vpop.f32.mrf.mxu0
      %v951 = vpop.f32.mrf.mxu0
      %v952 = vadd.f32 0.0, %v951
      %v953 = vpop.f32.mrf.mxu0
      %954 = vmatprep.mubr.bf16.mxu0 0
      %955 = vmatmul.mubr.bf16.gmra.mxu0 %v641
      %v956 = vpop.f32.mrf.mxu0
      %v957 = vadd.f32 0.0, %v956
      %v958 = vpop.f32.mrf.mxu0
      %v959 = vpop.f32.mrf.mxu0
      %v960 = vadd.f32 0.0, %v959
      %v961 = vpop.f32.mrf.mxu0
      %962 = vmatprep.mubr.bf16.mxu0 0
      %963 = vmatmul.mubr.bf16.gmra.mxu0 %v644
      %v964 = vpop.f32.mrf.mxu0
      %v965 = vadd.f32 0.0, %v964
      %v966 = vpop.f32.mrf.mxu0
      %v967 = vpop.f32.mrf.mxu0
      %v968 = vadd.f32 0.0, %v967
      %v969 = vpop.f32.mrf.mxu0
      %970 = vmatprep.mubr.bf16.mxu0 0
      %971 = vmatmul.mubr.bf16.gmra.mxu0 %v647
      %v972 = vpop.f32.mrf.mxu0
      %v973 = vadd.f32 0.0, %v972
      %v974 = vpop.f32.mrf.mxu0
      %v975 = vpop.f32.mrf.mxu0
      %v976 = vadd.f32 0.0, %v975
      %v977 = vpop.f32.mrf.mxu0
      %978 = vmatprep.mubr.bf16.mxu0 0
      %979 = vmatmul.mubr.bf16.gmra.mxu0 %v650
      %v980 = vpop.f32.mrf.mxu0
      %v981 = vadd.f32 0.0, %v980
      %v982 = vpop.f32.mrf.mxu0
      %v983 = vpop.f32.mrf.mxu0
      %v984 = vadd.f32 0.0, %v983
      %v985 = vpop.f32.mrf.mxu0
      %986 = vmatprep.mubr.bf16.mxu0 0
      %987 = vmatmul.mubr.bf16.gmra.mxu0 %v653
      %v988 = vpop.f32.mrf.mxu0
      %v989 = vadd.f32 0.0, %v988
      %v990 = vpop.f32.mrf.mxu0
      %v991 = vpop.f32.mrf.mxu0
      %v992 = vadd.f32 0.0, %v991
      %v993 = vpop.f32.mrf.mxu0
      %994 = vmatprep.mubr.bf16.mxu0 0
      %995 = vmatmul.mubr.bf16.gmra.mxu0 %v656
      %v996 = vpop.f32.mrf.mxu0
      %v997 = vadd.f32 0.0, %v996
      %v998 = vpop.f32.mrf.mxu0
      %v999 = vpop.f32.mrf.mxu0
      %v1000 = vadd.f32 0.0, %v999
      %v1001 = vpop.f32.mrf.mxu0
      %1002 = vmatprep.mubr.bf16.mxu0 0
      %1003 = vmatmul.mubr.bf16.gmra.mxu0 %v659
      %v1004 = vpop.f32.mrf.mxu0
      %v1005 = vadd.f32 0.0, %v1004
      %v1006 = vpop.f32.mrf.mxu0
      %v1007 = vpop.f32.mrf.mxu0
      %v1008 = vadd.f32 0.0, %v1007
      %v1009 = vpop.f32.mrf.mxu0
      %1010 = vmatprep.mubr.bf16.mxu0 0
      %1011 = vmatmul.mubr.bf16.gmra.mxu0 %v662
      %v1012 = vpop.f32.mrf.mxu0
      %v1013 = vadd.f32 0.0, %v1012
      %v1014 = vpop.f32.mrf.mxu0
      %v1015 = vpop.f32.mrf.mxu0
      %v1016 = vadd.f32 0.0, %v1015
      %v1017 = vpop.f32.mrf.mxu0
      %1018 = vmatprep.mubr.bf16.mxu0 0
      %1019 = vmatmul.mubr.bf16.gmra.mxu0 %v665
      %v1020 = vpop.f32.mrf.mxu0
      %v1021 = vadd.f32 0.0, %v1020
      %v1022 = vpop.f32.mrf.mxu0
      %v1023 = vpop.f32.mrf.mxu0
      %v1024 = vadd.f32 0.0, %v1023
      %v1025 = vpop.f32.mrf.mxu0
      %1026 = vmatprep.mubr.bf16.mxu0 0
      %1027 = vmatmul.mubr.bf16.gmra.mxu0 %v668
      %v1028 = vpop.f32.mrf.mxu0
      %v1029 = vadd.f32 0.0, %v1028
      %v1030 = vpop.f32.mrf.mxu0
      %v1031 = vpop.f32.mrf.mxu0
      %v1032 = vadd.f32 0.0, %v1031
      %v1033 = vpop.f32.mrf.mxu0
      %1034 = vmatprep.mubr.bf16.mxu0 0
      %1035 = vmatmul.mubr.bf16.gmra.mxu0 %v671
      %v1036 = vpop.f32.mrf.mxu0
      %v1037 = vadd.f32 0.0, %v1036
      %v1038 = vpop.f32.mrf.mxu0
      %v1039 = vpop.f32.mrf.mxu0
      %v1040 = vadd.f32 0.0, %v1039
      %v1041 = vpop.f32.mrf.mxu0
      %1042 = vmatprep.mubr.bf16.mxu0 0
      %1043 = vmatmul.mubr.bf16.gmra.mxu0 %v674
      %v1044 = vpop.f32.mrf.mxu0
      %v1045 = vadd.f32 0.0, %v1044
      %v1046 = vpop.f32.mrf.mxu0
      %v1047 = vpop.f32.mrf.mxu0
      %v1048 = vadd.f32 0.0, %v1047
      %v1049 = vpop.f32.mrf.mxu0
      %1050 = vmatprep.mubr.bf16.mxu0 0
      %1051 = vmatmul.mubr.bf16.gmra.mxu0 %v677
      %v1052 = vpop.f32.mrf.mxu0
      %v1053 = vadd.f32 0.0, %v1052
      %v1054 = vpop.f32.mrf.mxu0
      %v1055 = vpop.f32.mrf.mxu0
      %v1056 = vadd.f32 0.0, %v1055
      %v1057 = vpop.f32.mrf.mxu0
      %1058 = vmatprep.mubr.bf16.mxu0 0
      %1059 = vmatmul.mubr.bf16.gmra.mxu0 %v680
      %v1060 = vpop.f32.mrf.mxu0
      %v1061 = vadd.f32 0.0, %v1060
      %v1062 = vpop.f32.mrf.mxu0
      %v1063 = vpop.f32.mrf.mxu0
      %v1064 = vadd.f32 0.0, %v1063
      %v1065 = vpop.f32.mrf.mxu0
      %1066 = vmatprep.mubr.bf16.mxu0 0
      %1067 = vmatmul.mubr.bf16.gmra.mxu0 %v683
      %v1068 = vpop.f32.mrf.mxu0
      %v1069 = vadd.f32 0.0, %v1068
      %v1070 = vpop.f32.mrf.mxu0
      %v1071 = vpop.f32.mrf.mxu0
      %v1072 = vadd.f32 0.0, %v1071
      %v1073 = vpop.f32.mrf.mxu0
      %1074 = vmatprep.mubr.bf16.mxu0 0
      %1075 = vmatmul.mubr.bf16.gmra.mxu0 %v686
      %v1076 = vpop.f32.mrf.mxu0
      %v1077 = vadd.f32 0.0, %v1076
      %v1078 = vpop.f32.mrf.mxu0
      %v1079 = vpop.f32.mrf.mxu0
      %v1080 = vadd.f32 0.0, %v1079
      %v1081 = vpop.f32.mrf.mxu0
      %1082 = vmatprep.mubr.bf16.mxu0 0
      %1083 = vmatmul.mubr.bf16.gmra.mxu0 %v689
      %v1084 = vpop.f32.mrf.mxu0
      %v1085 = vadd.f32 0.0, %v1084
      %v1086 = vpop.f32.mrf.mxu0
      %v1087 = vpop.f32.mrf.mxu0
      %v1088 = vadd.f32 0.0, %v1087
      %v1089 = vpop.f32.mrf.mxu0
      %1090 = vmatprep.mubr.bf16.mxu0 0
      %1091 = vmatmul.mubr.bf16.gmra.mxu0 %v692
      %v1092 = vpop.f32.mrf.mxu0
      %v1093 = vadd.f32 0.0, %v1092
      %v1094 = vpop.f32.mrf.mxu0
      %v1095 = vpop.f32.mrf.mxu0
      %v1096 = vadd.f32 0.0, %v1095
      %v1097 = vpop.f32.mrf.mxu0
      %1098 = vmatprep.mubr.bf16.mxu0 0
      %1099 = vmatmul.mubr.bf16.gmra.mxu0 %v695
      %v1100 = vpop.f32.mrf.mxu0
      %v1101 = vadd.f32 0.0, %v1100
      %v1102 = vpop.f32.mrf.mxu0
      %v1103 = vpop.f32.mrf.mxu0
      %v1104 = vadd.f32 0.0, %v1103
      %v1105 = vpop.f32.mrf.mxu0
      %1106 = vmatprep.mubr.bf16.mxu0 0
      %1107 = vmatmul.mubr.bf16.gmra.mxu0 %v698
      %v1108 = vpop.f32.mrf.mxu0
      %v1109 = vadd.f32 0.0, %v1108
      %v1110 = vpop.f32.mrf.mxu0
      %v1111 = vpop.f32.mrf.mxu0
      %v1112 = vadd.f32 0.0, %v1111
      %v1113 = vpop.f32.mrf.mxu0
      %1114 = vmatprep.mubr.bf16.mxu0 0
      %1115 = vmatmul.mubr.bf16.gmra.mxu0 %v701
      %v1116 = vpop.f32.mrf.mxu0
      %v1117 = vadd.f32 0.0, %v1116
      %v1118 = vpop.f32.mrf.mxu0
      %v1119 = vpop.f32.mrf.mxu0
      %v1120 = vadd.f32 0.0, %v1119
      %v1121 = vpop.f32.mrf.mxu0
      %1122 = vmatprep.mubr.bf16.mxu0 0
      %1123 = vmatmul.mubr.bf16.gmra.mxu0 %v704
      %v1124 = vpop.f32.mrf.mxu0
      %v1125 = vadd.f32 0.0, %v1124
      %v1126 = vpop.f32.mrf.mxu0
      %v1127 = vpop.f32.mrf.mxu0
      %v1128 = vadd.f32 0.0, %v1127
      %v1129 = vpop.f32.mrf.mxu0
      %1130 = vmatprep.mubr.bf16.mxu0 0
      %1131 = vmatmul.mubr.bf16.gmra.mxu0 %v707
      %v1132 = vpop.f32.mrf.mxu0
      %v1133 = vadd.f32 0.0, %v1132
      %v1134 = vpop.f32.mrf.mxu0
      %v1135 = vpop.f32.mrf.mxu0
      %v1136 = vadd.f32 0.0, %v1135
      %v1137 = vpop.f32.mrf.mxu0
      %1138 = vmatprep.mubr.bf16.mxu0 0
      %1139 = vmatmul.mubr.bf16.gmra.mxu0 %v710
      %v1140 = vpop.f32.mrf.mxu0
      %v1141 = vadd.f32 0.0, %v1140
      %v1142 = vpop.f32.mrf.mxu0
      %v1143 = vpop.f32.mrf.mxu0
      %v1144 = vadd.f32 0.0, %v1143
      %v1145 = vpop.f32.mrf.mxu0
      %1146 = vmatprep.mubr.bf16.mxu0 0
      %1147 = vmatmul.mubr.bf16.gmra.mxu0 %v713
      %v1148 = vpop.f32.mrf.mxu0
      %v1149 = vadd.f32 0.0, %v1148
      %v1150 = vpop.f32.mrf.mxu0
      %v1151 = vpop.f32.mrf.mxu0
      %v1152 = vadd.f32 0.0, %v1151
      %v1153 = vpop.f32.mrf.mxu0
      %1154 = vdwg.mxu0
      %v1155 = vld [vmem:[%s2] sm:$0x1]
      %v1157 = vlaneseq
      %v1158 = vshrl.u32 %v1157, 7
      %v1159 = vsub.s32 0, %v1158
      %v1160 = vrot.slane %v1155, %v1159
      %v1162 = vmul.f32 %v757, %v1160
      %v1163 = vmul.f32 %v760, %v1160
      %v1164 = vmul.f32 %v765, %v1160
      %v1165 = vmul.f32 %v768, %v1160
      %v1166 = vmul.f32 %v773, %v1160
      %v1167 = vmul.f32 %v776, %v1160
      %v1168 = vmul.f32 %v781, %v1160
      %v1169 = vmul.f32 %v784, %v1160
      %v1170 = vmul.f32 %v789, %v1160
      %v1171 = vmul.f32 %v792, %v1160
      %v1172 = vmul.f32 %v797, %v1160
      %v1173 = vmul.f32 %v800, %v1160
      %v1174 = vmul.f32 %v805, %v1160
      %v1175 = vmul.f32 %v808, %v1160
      %v1176 = vmul.f32 %v813, %v1160
      %v1177 = vmul.f32 %v816, %v1160
      %v1178 = vmul.f32 %v821, %v1160
      %v1179 = vmul.f32 %v824, %v1160
      %v1180 = vmul.f32 %v829, %v1160
      %v1181 = vmul.f32 %v832, %v1160
      %v1182 = vmul.f32 %v837, %v1160
      %v1183 = vmul.f32 %v840, %v1160
      %v1184 = vmul.f32 %v845, %v1160
      %v1185 = vmul.f32 %v848, %v1160
      %v1186 = vmul.f32 %v853, %v1160
      %v1187 = vmul.f32 %v856, %v1160
      %v1188 = vmul.f32 %v861, %v1160
      %v1189 = vmul.f32 %v864, %v1160
      %v1190 = vmul.f32 %v869, %v1160
      %v1191 = vmul.f32 %v872, %v1160
      %v1192 = vmul.f32 %v877, %v1160
      %v1193 = vmul.f32 %v880, %v1160
      %v1194 = vmul.f32 %v885, %v1160
      %v1195 = vmul.f32 %v888, %v1160
      %v1196 = vmul.f32 %v893, %v1160
      %v1197 = vmul.f32 %v896, %v1160
      %v1198 = vmul.f32 %v901, %v1160
      %v1199 = vmul.f32 %v904, %v1160
      %v1200 = vmul.f32 %v909, %v1160
      %v1201 = vmul.f32 %v912, %v1160
      %v1202 = vmul.f32 %v917, %v1160
      %v1203 = vmul.f32 %v920, %v1160
      %v1204 = vmul.f32 %v925, %v1160
      %v1205 = vmul.f32 %v928, %v1160
      %v1206 = vmul.f32 %v933, %v1160
      %v1207 = vmul.f32 %v936, %v1160
      %v1208 = vmul.f32 %v941, %v1160
      %v1209 = vmul.f32 %v944, %v1160
      %v1210 = vmul.f32 %v949, %v1160
      %v1211 = vmul.f32 %v952, %v1160
      %v1212 = vmul.f32 %v957, %v1160
      %v1213 = vmul.f32 %v960, %v1160
      %v1214 = vmul.f32 %v965, %v1160
      %v1215 = vmul.f32 %v968, %v1160
      %v1216 = vmul.f32 %v973, %v1160
      %v1217 = vmul.f32 %v976, %v1160
      %v1218 = vmul.f32 %v981, %v1160
      %v1219 = vmul.f32 %v984, %v1160
      %v1220 = vmul.f32 %v989, %v1160
      %v1221 = vmul.f32 %v992, %v1160
      %v1222 = vmul.f32 %v997, %v1160
      %v1223 = vmul.f32 %v1000, %v1160
      %v1224 = vmul.f32 %v1005, %v1160
      %v1225 = vmul.f32 %v1008, %v1160
      %v1226 = vmul.f32 %v1013, %v1160
      %v1227 = vmul.f32 %v1016, %v1160
      %v1228 = vmul.f32 %v1021, %v1160
      %v1229 = vmul.f32 %v1024, %v1160
      %v1230 = vmul.f32 %v1029, %v1160
      %v1231 = vmul.f32 %v1032, %v1160
      %v1232 = vmul.f32 %v1037, %v1160
      %v1233 = vmul.f32 %v1040, %v1160
      %v1234 = vmul.f32 %v1045, %v1160
      %v1235 = vmul.f32 %v1048, %v1160
      %v1236 = vmul.f32 %v1053, %v1160
      %v1237 = vmul.f32 %v1056, %v1160
      %v1238 = vmul.f32 %v1061, %v1160
      %v1239 = vmul.f32 %v1064, %v1160
      %v1240 = vmul.f32 %v1069, %v1160
      %v1241 = vmul.f32 %v1072, %v1160
      %v1242 = vmul.f32 %v1077, %v1160
      %v1243 = vmul.f32 %v1080, %v1160
      %v1244 = vmul.f32 %v1085, %v1160
      %v1245 = vmul.f32 %v1088, %v1160
      %v1246 = vmul.f32 %v1093, %v1160
      %v1247 = vmul.f32 %v1096, %v1160
      %v1248 = vmul.f32 %v1101, %v1160
      %v1249 = vmul.f32 %v1104, %v1160
      %v1250 = vmul.f32 %v1109, %v1160
      %v1251 = vmul.f32 %v1112, %v1160
      %v1252 = vmul.f32 %v1117, %v1160
      %v1253 = vmul.f32 %v1120, %v1160
      %v1254 = vmul.f32 %v1125, %v1160
      %v1255 = vmul.f32 %v1128, %v1160
      %v1256 = vmul.f32 %v1133, %v1160
      %v1257 = vmul.f32 %v1136, %v1160
      %v1258 = vmul.f32 %v1141, %v1160
      %v1259 = vmul.f32 %v1144, %v1160
      %v1260 = vmul.f32 %v1149, %v1160
      %v1261 = vmul.f32 %v1152, %v1160
      %v1262 = vld [vmem:[%s3] sm:$0x1]
      %v1264 = vlaneseq
      %v1265 = vshrl.u32 %v1264, 7
      %v1266 = vsub.s32 0, %v1265
      %v1267 = vrot.slane %v1262, %v1266
      %v1269 = vadd.f32 %v1162, %v1267
      %v1270 = vadd.f32 %v1163, %v1267
      %v1271 = vadd.f32 %v1164, %v1267
      %v1272 = vadd.f32 %v1165, %v1267
      %v1273 = vadd.f32 %v1166, %v1267
      %v1274 = vadd.f32 %v1167, %v1267
      %v1275 = vadd.f32 %v1168, %v1267
      %v1276 = vadd.f32 %v1169, %v1267
      %v1277 = vadd.f32 %v1170, %v1267
      %v1278 = vadd.f32 %v1171, %v1267
      %v1279 = vadd.f32 %v1172, %v1267
      %v1280 = vadd.f32 %v1173, %v1267
      %v1281 = vadd.f32 %v1174, %v1267
      %v1282 = vadd.f32 %v1175, %v1267
      %v1283 = vadd.f32 %v1176, %v1267
      %v1284 = vadd.f32 %v1177, %v1267
      %v1285 = vadd.f32 %v1178, %v1267
      %v1286 = vadd.f32 %v1179, %v1267
      %v1287 = vadd.f32 %v1180, %v1267
      %v1288 = vadd.f32 %v1181, %v1267
      %v1289 = vadd.f32 %v1182, %v1267
      %v1290 = vadd.f32 %v1183, %v1267
      %v1291 = vadd.f32 %v1184, %v1267
      %v1292 = vadd.f32 %v1185, %v1267
      %v1293 = vadd.f32 %v1186, %v1267
      %v1294 = vadd.f32 %v1187, %v1267
      %v1295 = vadd.f32 %v1188, %v1267
      %v1296 = vadd.f32 %v1189, %v1267
      %v1297 = vadd.f32 %v1190, %v1267
      %v1298 = vadd.f32 %v1191, %v1267
      %v1299 = vadd.f32 %v1192, %v1267
      %v1300 = vadd.f32 %v1193, %v1267
      %v1301 = vadd.f32 %v1194, %v1267
      %v1302 = vadd.f32 %v1195, %v1267
      %v1303 = vadd.f32 %v1196, %v1267
      %v1304 = vadd.f32 %v1197, %v1267
      %v1305 = vadd.f32 %v1198, %v1267
      %v1306 = vadd.f32 %v1199, %v1267
      %v1307 = vadd.f32 %v1200, %v1267
      %v1308 = vadd.f32 %v1201, %v1267
      %v1309 = vadd.f32 %v1202, %v1267
      %v1310 = vadd.f32 %v1203, %v1267
      %v1311 = vadd.f32 %v1204, %v1267
      %v1312 = vadd.f32 %v1205, %v1267
      %v1313 = vadd.f32 %v1206, %v1267
      %v1314 = vadd.f32 %v1207, %v1267
      %v1315 = vadd.f32 %v1208, %v1267
      %v1316 = vadd.f32 %v1209, %v1267
      %v1317 = vadd.f32 %v1210, %v1267
      %v1318 = vadd.f32 %v1211, %v1267
      %v1319 = vadd.f32 %v1212, %v1267
      %v1320 = vadd.f32 %v1213, %v1267
      %v1321 = vadd.f32 %v1214, %v1267
      %v1322 = vadd.f32 %v1215, %v1267
      %v1323 = vadd.f32 %v1216, %v1267
      %v1324 = vadd.f32 %v1217, %v1267
      %v1325 = vadd.f32 %v1218, %v1267
      %v1326 = vadd.f32 %v1219, %v1267
      %v1327 = vadd.f32 %v1220, %v1267
      %v1328 = vadd.f32 %v1221, %v1267
      %v1329 = vadd.f32 %v1222, %v1267
      %v1330 = vadd.f32 %v1223, %v1267
      %v1331 = vadd.f32 %v1224, %v1267
      %v1332 = vadd.f32 %v1225, %v1267
      %v1333 = vadd.f32 %v1226, %v1267
      %v1334 = vadd.f32 %v1227, %v1267
      %v1335 = vadd.f32 %v1228, %v1267
      %v1336 = vadd.f32 %v1229, %v1267
      %v1337 = vadd.f32 %v1230, %v1267
      %v1338 = vadd.f32 %v1231, %v1267
      %v1339 = vadd.f32 %v1232, %v1267
      %v1340 = vadd.f32 %v1233, %v1267
      %v1341 = vadd.f32 %v1234, %v1267
      %v1342 = vadd.f32 %v1235, %v1267
      %v1343 = vadd.f32 %v1236, %v1267
      %v1344 = vadd.f32 %v1237, %v1267
      %v1345 = vadd.f32 %v1238, %v1267
      %v1346 = vadd.f32 %v1239, %v1267
      %v1347 = vadd.f32 %v1240, %v1267
      %v1348 = vadd.f32 %v1241, %v1267
      %v1349 = vadd.f32 %v1242, %v1267
      %v1350 = vadd.f32 %v1243, %v1267
      %v1351 = vadd.f32 %v1244, %v1267
      %v1352 = vadd.f32 %v1245, %v1267
      %v1353 = vadd.f32 %v1246, %v1267
      %v1354 = vadd.f32 %v1247, %v1267
      %v1355 = vadd.f32 %v1248, %v1267
      %v1356 = vadd.f32 %v1249, %v1267
      %v1357 = vadd.f32 %v1250, %v1267
      %v1358 = vadd.f32 %v1251, %v1267
      %v1359 = vadd.f32 %v1252, %v1267
      %v1360 = vadd.f32 %v1253, %v1267
      %v1361 = vadd.f32 %v1254, %v1267
      %v1362 = vadd.f32 %v1255, %v1267
      %v1363 = vadd.f32 %v1256, %v1267
      %v1364 = vadd.f32 %v1257, %v1267
      %v1365 = vadd.f32 %v1258, %v1267
      %v1366 = vadd.f32 %v1259, %v1267
      %v1367 = vadd.f32 %v1260, %v1267
      %v1368 = vadd.f32 %v1261, %v1267
      %v1369 = vmax.f32 %v1269, 0.0
      %v1370 = vmax.f32 %v1270, 0.0
      %v1371 = vmax.f32 %v1271, 0.0
      %v1372 = vmax.f32 %v1272, 0.0
      %v1373 = vmax.f32 %v1273, 0.0
      %v1374 = vmax.f32 %v1274, 0.0
      %v1375 = vmax.f32 %v1275, 0.0
      %v1376 = vmax.f32 %v1276, 0.0
      %v1377 = vmax.f32 %v1277, 0.0
      %v1378 = vmax.f32 %v1278, 0.0
      %v1379 = vmax.f32 %v1279, 0.0
      %v1380 = vmax.f32 %v1280, 0.0
      %v1381 = vmax.f32 %v1281, 0.0
      %v1382 = vmax.f32 %v1282, 0.0
      %v1383 = vmax.f32 %v1283, 0.0
      %v1384 = vmax.f32 %v1284, 0.0
      %v1385 = vmax.f32 %v1285, 0.0
      %v1386 = vmax.f32 %v1286, 0.0
      %v1387 = vmax.f32 %v1287, 0.0
      %v1388 = vmax.f32 %v1288, 0.0
      %v1389 = vmax.f32 %v1289, 0.0
      %v1390 = vmax.f32 %v1290, 0.0
      %v1391 = vmax.f32 %v1291, 0.0
      %v1392 = vmax.f32 %v1292, 0.0
      %v1393 = vmax.f32 %v1293, 0.0
      %v1394 = vmax.f32 %v1294, 0.0
      %v1395 = vmax.f32 %v1295, 0.0
      %v1396 = vmax.f32 %v1296, 0.0
      %v1397 = vmax.f32 %v1297, 0.0
      %v1398 = vmax.f32 %v1298, 0.0
      %v1399 = vmax.f32 %v1299, 0.0
      %v1400 = vmax.f32 %v1300, 0.0
      %v1401 = vmax.f32 %v1301, 0.0
      %v1402 = vmax.f32 %v1302, 0.0
      %v1403 = vmax.f32 %v1303, 0.0
      %v1404 = vmax.f32 %v1304, 0.0
      %v1405 = vmax.f32 %v1305, 0.0
      %v1406 = vmax.f32 %v1306, 0.0
      %v1407 = vmax.f32 %v1307, 0.0
      %v1408 = vmax.f32 %v1308, 0.0
      %v1409 = vmax.f32 %v1309, 0.0
      %v1410 = vmax.f32 %v1310, 0.0
      %v1411 = vmax.f32 %v1311, 0.0
      %v1412 = vmax.f32 %v1312, 0.0
      %v1413 = vmax.f32 %v1313, 0.0
      %v1414 = vmax.f32 %v1314, 0.0
      %v1415 = vmax.f32 %v1315, 0.0
      %v1416 = vmax.f32 %v1316, 0.0
      %v1417 = vmax.f32 %v1317, 0.0
      %v1418 = vmax.f32 %v1318, 0.0
      %v1419 = vmax.f32 %v1319, 0.0
      %v1420 = vmax.f32 %v1320, 0.0
      %v1421 = vmax.f32 %v1321, 0.0
      %v1422 = vmax.f32 %v1322, 0.0
      %v1423 = vmax.f32 %v1323, 0.0
      %v1424 = vmax.f32 %v1324, 0.0
      %v1425 = vmax.f32 %v1325, 0.0
      %v1426 = vmax.f32 %v1326, 0.0
      %v1427 = vmax.f32 %v1327, 0.0
      %v1428 = vmax.f32 %v1328, 0.0
      %v1429 = vmax.f32 %v1329, 0.0
      %v1430 = vmax.f32 %v1330, 0.0
      %v1431 = vmax.f32 %v1331, 0.0
      %v1432 = vmax.f32 %v1332, 0.0
      %v1433 = vmax.f32 %v1333, 0.0
      %v1434 = vmax.f32 %v1334, 0.0
      %v1435 = vmax.f32 %v1335, 0.0
      %v1436 = vmax.f32 %v1336, 0.0
      %v1437 = vmax.f32 %v1337, 0.0
      %v1438 = vmax.f32 %v1338, 0.0
      %v1439 = vmax.f32 %v1339, 0.0
      %v1440 = vmax.f32 %v1340, 0.0
      %v1441 = vmax.f32 %v1341, 0.0
      %v1442 = vmax.f32 %v1342, 0.0
      %v1443 = vmax.f32 %v1343, 0.0
      %v1444 = vmax.f32 %v1344, 0.0
      %v1445 = vmax.f32 %v1345, 0.0
      %v1446 = vmax.f32 %v1346, 0.0
      %v1447 = vmax.f32 %v1347, 0.0
      %v1448 = vmax.f32 %v1348, 0.0
      %v1449 = vmax.f32 %v1349, 0.0
      %v1450 = vmax.f32 %v1350, 0.0
      %v1451 = vmax.f32 %v1351, 0.0
      %v1452 = vmax.f32 %v1352, 0.0
      %v1453 = vmax.f32 %v1353, 0.0
      %v1454 = vmax.f32 %v1354, 0.0
      %v1455 = vmax.f32 %v1355, 0.0
      %v1456 = vmax.f32 %v1356, 0.0
      %v1457 = vmax.f32 %v1357, 0.0
      %v1458 = vmax.f32 %v1358, 0.0
      %v1459 = vmax.f32 %v1359, 0.0
      %v1460 = vmax.f32 %v1360, 0.0
      %v1461 = vmax.f32 %v1361, 0.0
      %v1462 = vmax.f32 %v1362, 0.0
      %v1463 = vmax.f32 %v1363, 0.0
      %v1464 = vmax.f32 %v1364, 0.0
      %v1465 = vmax.f32 %v1365, 0.0
      %v1466 = vmax.f32 %v1366, 0.0
      %v1467 = vmax.f32 %v1367, 0.0
      %v1468 = vmax.f32 %v1368, 0.0
      %v1469 = vmax.f32 %v1369, %v1394
      %v1470 = vmax.f32 %v1370, %v1395
      %v1471 = vmax.f32 %v1371, %v1396
      %v1472 = vmax.f32 %v1372, %v1397
      %v1473 = vmax.f32 %v1373, %v1398
      %v1474 = vmax.f32 %v1374, %v1399
      %v1475 = vmax.f32 %v1375, %v1400
      %v1476 = vmax.f32 %v1376, %v1401
      %v1477 = vmax.f32 %v1377, %v1402
      %v1478 = vmax.f32 %v1378, %v1403
      %v1479 = vmax.f32 %v1379, %v1404
      %v1480 = vmax.f32 %v1380, %v1405
      %v1481 = vmax.f32 %v1381, %v1406
      %v1482 = vmax.f32 %v1382, %v1407
      %v1483 = vmax.f32 %v1383, %v1408
      %v1484 = vmax.f32 %v1384, %v1409
      %v1485 = vmax.f32 %v1385, %v1410
      %v1486 = vmax.f32 %v1386, %v1411
      %v1487 = vmax.f32 %v1387, %v1412
      %v1488 = vmax.f32 %v1388, %v1413
      %v1489 = vmax.f32 %v1389, %v1414
      %v1490 = vmax.f32 %v1390, %v1415
      %v1491 = vmax.f32 %v1391, %v1416
      %v1492 = vmax.f32 %v1392, %v1417
      %v1493 = vmax.f32 %v1393, %v1418
      %v1494 = vmax.f32 %v1419, %v1444
      %v1495 = vmax.f32 %v1420, %v1445
      %v1496 = vmax.f32 %v1421, %v1446
      %v1497 = vmax.f32 %v1422, %v1447
      %v1498 = vmax.f32 %v1423, %v1448
      %v1499 = vmax.f32 %v1424, %v1449
      %v1500 = vmax.f32 %v1425, %v1450
      %v1501 = vmax.f32 %v1426, %v1451
      %v1502 = vmax.f32 %v1427, %v1452
      %v1503 = vmax.f32 %v1428, %v1453
      %v1504 = vmax.f32 %v1429, %v1454
      %v1505 = vmax.f32 %v1430, %v1455
      %v1506 = vmax.f32 %v1431, %v1456
      %v1507 = vmax.f32 %v1432, %v1457
      %v1508 = vmax.f32 %v1433, %v1458
      %v1509 = vmax.f32 %v1434, %v1459
      %v1510 = vmax.f32 %v1435, %v1460
      %v1511 = vmax.f32 %v1436, %v1461
      %v1512 = vmax.f32 %v1437, %v1462
      %v1513 = vmax.f32 %v1438, %v1463
      %v1514 = vmax.f32 %v1439, %v1464
      %v1515 = vmax.f32 %v1440, %v1465
      %v1516 = vmax.f32 %v1441, %v1466
      %v1517 = vmax.f32 %v1442, %v1467
      %v1518 = vmax.f32 %v1443, %v1468
      %v1519 = vmax.f32 %v1469, %v1494
      %v1520 = vmax.f32 %v1470, %v1495
      %v1521 = vmax.f32 %v1471, %v1496
      %v1522 = vmax.f32 %v1472, %v1497
      %v1523 = vmax.f32 %v1473, %v1498
      %v1524 = vmax.f32 %v1474, %v1499
      %v1525 = vmax.f32 %v1475, %v1500
      %v1526 = vmax.f32 %v1476, %v1501
      %v1527 = vmax.f32 %v1477, %v1502
      %v1528 = vmax.f32 %v1478, %v1503
      %v1529 = vmax.f32 %v1479, %v1504
      %v1530 = vmax.f32 %v1480, %v1505
      %v1531 = vmax.f32 %v1481, %v1506
      %v1532 = vmax.f32 %v1482, %v1507
      %v1533 = vmax.f32 %v1483, %v1508
      %v1534 = vmax.f32 %v1484, %v1509
      %v1535 = vmax.f32 %v1485, %v1510
      %v1536 = vmax.f32 %v1486, %v1511
      %v1537 = vmax.f32 %v1487, %v1512
      %v1538 = vmax.f32 %v1488, %v1513
      %v1539 = vmax.f32 %v1489, %v1514
      %v1540 = vmax.f32 %v1490, %v1515
      %v1541 = vmax.f32 %v1491, %v1516
      %v1542 = vmax.f32 %v1492, %v1517
      %v1543 = vmax.f32 %v1493, %v1518
      %v1544 = vpack.c.bf16 %v1520, %v1519
      %v1545 = vpack.c.bf16 %v1522, %v1521
      %v1546 = vpack.c.bf16 %v1524, %v1523
      %v1547 = vpack.c.bf16 %v1526, %v1525
      %v1548 = vpack.c.bf16 %v1528, %v1527
      %v1549 = vpack.c.bf16 %v1530, %v1529
      %v1550 = vpack.c.bf16 %v1532, %v1531
      %v1551 = vpack.c.bf16 %v1534, %v1533
      %v1552 = vpack.c.bf16 %v1536, %v1535
      %v1553 = vpack.c.bf16 %v1538, %v1537
      %v1554 = vpack.c.bf16 %v1540, %v1539
      %v1555 = vpack.c.bf16 %v1542, %v1541
      %v1556 = vpack.c.bf16 %v1543, %v1543
      %v1570 = vunpack.c.l.b16 %v1544
      %v1571 = vunpack.c.h.b16 %v1544
      %v1572 = vunpack.c.l.b16 %v1545
      %v1573 = vunpack.c.h.b16 %v1545
      %v1574 = vunpack.c.l.b16 %v1546
      %v1575 = vunpack.c.h.b16 %v1546
      %v1576 = vunpack.c.l.b16 %v1547
      %v1577 = vunpack.c.h.b16 %v1547
      %v1578 = vunpack.c.l.b16 %v1548
      %v1579 = vunpack.c.h.b16 %v1548
      %v1580 = vunpack.c.l.b16 %v1549
      %v1581 = vunpack.c.h.b16 %v1549
      %v1582 = vunpack.c.l.b16 %v1550
      %v1583 = vunpack.c.h.b16 %v1550
      %v1584 = vunpack.c.l.b16 %v1551
      %v1585 = vunpack.c.h.b16 %v1551
      %v1586 = vunpack.c.l.b16 %v1552
      %v1587 = vunpack.c.h.b16 %v1552
      %v1588 = vunpack.c.l.b16 %v1553
      %v1589 = vunpack.c.h.b16 %v1553
      %v1590 = vunpack.c.l.b16 %v1554
      %v1591 = vunpack.c.h.b16 %v1554
      %v1592 = vunpack.c.l.b16 %v1555
      %v1593 = vunpack.c.h.b16 %v1555
      %v1594 = vunpack.c.l.b16 %v1556
      %v1595 = vpack.c.b16 %v1570, %v1570
      %v1596 = vpack.c.b16 %v1571, %v1571
      %v1597 = vpack.c.b16 %v1572, %v1572
      %v1598 = vpack.c.b16 %v1573, %v1573
      %v1599 = vpack.c.b16 %v1574, %v1574
      %v1600 = vpack.c.b16 %v1575, %v1575
      %v1601 = vpack.c.b16 %v1576, %v1576
      %v1602 = vpack.c.b16 %v1577, %v1577
      %v1603 = vpack.c.b16 %v1578, %v1578
      %v1604 = vpack.c.b16 %v1579, %v1579
      %v1605 = vpack.c.b16 %v1580, %v1580
      %v1606 = vpack.c.b16 %v1581, %v1581
      %v1607 = vpack.c.b16 %v1582, %v1582
      %v1608 = vpack.c.b16 %v1583, %v1583
      %v1609 = vpack.c.b16 %v1584, %v1584
      %v1610 = vpack.c.b16 %v1585, %v1585
      %v1611 = vpack.c.b16 %v1586, %v1586
      %v1612 = vpack.c.b16 %v1587, %v1587
      %v1613 = vpack.c.b16 %v1588, %v1588
      %v1614 = vpack.c.b16 %v1589, %v1589
      %v1615 = vpack.c.b16 %v1590, %v1590
      %v1616 = vpack.c.b16 %v1591, %v1591
      %v1617 = vpack.c.b16 %v1592, %v1592
      %v1618 = vpack.c.b16 %v1593, %v1593
      %v1619 = vpack.c.b16 %v1594, %v1594
      %vm1645 = vcmask 519168
      %1646 = vst.msk [vmem:[%s197] sm:$0xf] %vm1645, %v1595
      %1647 = vst.msk [vmem:[%s197 + $0x4] sm:$0xf] %vm1645, %v1596
      %1648 = vst.msk [vmem:[%s197 + $0x8] sm:$0xf] %vm1645, %v1597
      %1649 = vst.msk [vmem:[%s197 + $0xc] sm:$0xf] %vm1645, %v1598
      %1650 = vst.msk [vmem:[%s197 + $0x10] sm:$0xf] %vm1645, %v1599
      %1651 = vst.msk [vmem:[%s197 + $0x14] sm:$0xf] %vm1645, %v1600
      %1652 = vst.msk [vmem:[%s197 + $0x18] sm:$0xf] %vm1645, %v1601
      %1653 = vst.msk [vmem:[%s197 + $0x1c] sm:$0xf] %vm1645, %v1602
      %1654 = vst.msk [vmem:[%s197 + $0x20] sm:$0xf] %vm1645, %v1603
      %1655 = vst.msk [vmem:[%s197 + $0x24] sm:$0xf] %vm1645, %v1604
      %1656 = vst.msk [vmem:[%s197 + $0x28] sm:$0xf] %vm1645, %v1605
      %1657 = vst.msk [vmem:[%s197 + $0x2c] sm:$0xf] %vm1645, %v1606
      %1658 = vst.msk [vmem:[%s197 + $0x30] sm:$0xf] %vm1645, %v1607
      %1659 = vst.msk [vmem:[%s197 + $0x34] sm:$0xf] %vm1645, %v1608
      %1660 = vst.msk [vmem:[%s197 + $0x38] sm:$0xf] %vm1645, %v1609
      %1661 = vst.msk [vmem:[%s197 + $0x3c] sm:$0xf] %vm1645, %v1610
      %1662 = vst.msk [vmem:[%s197 + $0x40] sm:$0xf] %vm1645, %v1611
      %1663 = vst.msk [vmem:[%s197 + $0x44] sm:$0xf] %vm1645, %v1612
      %1664 = vst.msk [vmem:[%s197 + $0x48] sm:$0xf] %vm1645, %v1613
      %1665 = vst.msk [vmem:[%s197 + $0x4c] sm:$0xf] %vm1645, %v1614
      %1666 = vst.msk [vmem:[%s197 + $0x50] sm:$0xf] %vm1645, %v1615
      %1667 = vst.msk [vmem:[%s197 + $0x54] sm:$0xf] %vm1645, %v1616
      %1668 = vst.msk [vmem:[%s197 + $0x58] sm:$0xf] %vm1645, %v1617
      %1669 = vst.msk [vmem:[%s197 + $0x5c] sm:$0xf] %vm1645, %v1618
      %vm1670 = vcmask 517120
      %1671 = vst.msk [vmem:[%s197 + $0x60] sm:$0x3] %vm1670, %v1619
      %p1672 = scmp.lt.s32.totalorder %s15, 1
      %s1673 = scalar_select %p1672, %s15, 1
      %s1674 = smul.addr %s1673, 25
      %s1675 = smul.addr %s1674, 4
      %s1676 = scalar_lea.vmem %s4, %s1675
      // Predicated region
      $region37: #{tpu_custom_call.1} parent=35 // pred_check
        %p1677 = pneg %p122
      $region38: #{tpu_custom_call.1} parent=35 // pred_check_branch
        %1679 = sbr.rel (%p1677) target = $region40
      $region39: #{tpu_custom_call.1} parent=35 // pred_region
        _
      $region40: #{tpu_custom_call.1} parent=35 // pred_fallthru
        _
    $region36: #{tpu_custom_call.1} parent=5 // pred_fallthru
      _
    %p1680 = scmp.le.s32.totalorder 2, %s10
    // Predicated region
    $region41: #{tpu_custom_call.1} parent=5 // pred_check
      %p1681 = pneg %p1680
    $region42: #{tpu_custom_call.1} parent=5 // pred_check_branch
      %1683 = sbr.rel (%p1681) target = $region44
    $region43: #{tpu_custom_call.1} parent=5 // pred_region
      %s1684 = ssub.s32 %s10, 2
      // Predicated region
      $region45: #{tpu_custom_call.1} parent=43 // pred_check
        %p1685 = pneg %p128
      $region46: #{tpu_custom_call.1} parent=43 // pred_check_branch
        %1687 = sbr.rel (%p1685) target = $region48
      $region47: #{tpu_custom_call.1} parent=43 // pred_region
        %p1688 = scmp.lt.s32.totalorder %s16, 1
        %s1689 = scalar_select %p1688, %s16, 1
        %s1690 = smul.addr %s1689, 25
        %s1691 = smul.addr %s1690, 4
        %s1692 = scalar_lea.vmem %s4, %s1691
      $region48: #{tpu_custom_call.1} parent=43 // pred_fallthru
        _
    $region44: #{tpu_custom_call.1} parent=5 // pred_fallthru
      _
  $region6: #{tpu_custom_call.1} parent=0 // loop_footer
    %s14 = sadd.s32 1, %s10
  $region7: #{tpu_custom_call.1} parent=0 // loop_footer_branch
    %9 = sbr.rel target = $region3
  $region8: #{tpu_custom_call.1} parent=0 // loop_exit
    _

</llo_original>
